<compile_context>
chip_gen: v7x
topology: tpu7x:2x2x1
jax: 0.10.0
libtpu: 0.0.40
codegen_flags: <defaults>
</compile_context>

<pallas_src>
import functools

import jax
import jax.numpy as jnp
import numpy as np
from jax.experimental import pallas as pl
from jax.experimental.pallas import tpu as pltpu


def _round_up(x, m):
    return ((x + m - 1) // m) * m


def _choose_m_tile(m):
    """Pick a lane tile (multiple of 128, <= 1024) and the padded M."""
    tm = min(_round_up(m, 128), 1024)
    return _round_up(m, tm), tm


# ----------------------------------------------------------------------------
# Pallas kernel: fused (W @ X) + bias + activation, output (Cout_pad, TM)
# ----------------------------------------------------------------------------
def _fused_matmul_kernel(w_ref, x_ref, b_ref, o_ref, *, act):
    # w_ref: (Cout_pad, K) bf16, x_ref: (K, TM) bf16, b_ref: (Cout_pad, 1) f32
    acc = jnp.dot(w_ref[...], x_ref[...], preferred_element_type=jnp.float32)
    acc = acc + b_ref[...]
    if act == "leaky_relu":
        acc = jnp.where(acc >= 0.0, acc, 0.2 * acc)
    elif act == "tanh":
        acc = jnp.tanh(acc)
    else:
        raise ValueError(act)
    o_ref[...] = acc


def fused_matmul_bias_act(w_all, x_all, bias_pad, act, tm):
    """w_all: (P, Cp, K) bf16, x_all: (P, K, Mp) bf16, bias_pad: (Cp, 1) f32.

    Returns (P, Cp, Mp) f32 with bias + activation fused in.
    """
    P, Cp, K = w_all.shape
    Mp = x_all.shape[-1]
    assert Mp % tm == 0 and tm % 128 == 0 and Cp % 8 == 0

    return pl.pallas_call(
        functools.partial(_fused_matmul_kernel, act=act),
        out_shape=jax.ShapeDtypeStruct((P, Cp, Mp), jnp.float32),
        grid=(P, Mp // tm),
        in_specs=[
            pl.BlockSpec((None, Cp, K), lambda p, m: (p, 0, 0)),   # weights
            pl.BlockSpec((None, K, tm), lambda p, m: (p, 0, m)),   # patches
            pl.BlockSpec((Cp, 1), lambda p, m: (0, 0)),            # bias
        ],
        out_specs=pl.BlockSpec((None, Cp, tm), lambda p, m: (p, 0, m)),
        compiler_params=pltpu.CompilerParams(
            dimension_semantics=("parallel", "parallel")),
    )(w_all, x_all, bias_pad)


# ----------------------------------------------------------------------------
# Layer 1: ConvTranspose2d(noise, C, 4, stride=1, pad=0) on a 1x1 input.
# This is exactly a dense matmul:  out[(cout,i,j), n] = W @ x[cin, n].
# ----------------------------------------------------------------------------
def _first_layer(x_cn, w_ct, bias):
    Cin, N = x_cn.shape
    _, Cout, kH, kW = w_ct.shape
    C1 = Cout * kH * kW
    Cp = _round_up(C1, 8)
    Mp, tm = _choose_m_tile(N)

    w_mat = jnp.transpose(w_ct, (1, 2, 3, 0)).reshape(C1, Cin)     # ((cout,i,j), cin)
    w_mat = jnp.pad(w_mat, ((0, Cp - C1), (0, 0))).astype(jnp.bfloat16)
    b_vec = jnp.pad(jnp.repeat(bias, kH * kW), (0, Cp - C1)).reshape(Cp, 1)
    x_pad = jnp.pad(x_cn, ((0, 0), (0, Mp - N))).astype(jnp.bfloat16)

    out = fused_matmul_bias_act(w_mat[None], x_pad[None], b_vec,
                                act="leaky_relu", tm=tm)
    out = out[0, :C1, :N].reshape(Cout, kH, kW, N)
    return jnp.transpose(out, (0, 3, 1, 2))                        # (Cout, N, 4, 4)


# ----------------------------------------------------------------------------
# Layers 2-5: ConvTranspose2d(k=4, stride=2, pad=1) via sub-pixel decomposition.
# out[2p+dy, 2q+dx] = sum_{a,b in {0,1}} x_pad[p+dy+a, q+dx+b] * w[:,:,3-dy-2a,3-dx-2b]
# ----------------------------------------------------------------------------
def _upsample_layer(x, w_ct, bias, act):
    Cin, N, H, W = x.shape
    _, Cout, kH, kW = w_ct.shape
    assert (kH, kW) == (4, 4)
    M = N * H * W
    K = 4 * Cin
    Cp = _round_up(Cout, 8)
    Mp, tm = _choose_m_tile(M)

    xb = x.astype(jnp.bfloat16)
    xp = jnp.pad(xb, ((0, 0), (0, 0), (1, 1), (1, 1)))

    patches, weights = [], []
    for dy in (0, 1):
        for dx in (0, 1):
            win, sub = [], []
            for a in (0, 1):
                for b in (0, 1):
                    win.append(xp[:, :, dy + a:dy + a + H, dx + b:dx + b + W])
                    sub.append(w_ct[:, :, 3 - dy - 2 * a, 3 - dx - 2 * b])
            patches.append(jnp.stack(win, axis=0).reshape(K, M))   # ((a,b,cin), m)
            weights.append(jnp.concatenate(sub, axis=0).T)         # (Cout, K)

    patches = jnp.stack(patches, axis=0)                           # (4, K, M)
    patches = jnp.pad(patches, ((0, 0), (0, 0), (0, Mp - M)))
    w_all = jnp.stack(weights, axis=0)                             # (4, Cout, K)
    w_all = jnp.pad(w_all, ((0, 0), (0, Cp - Cout), (0, 0))).astype(jnp.bfloat16)
    b_vec = jnp.pad(bias, (0, Cp - Cout)).reshape(Cp, 1)

    out = fused_matmul_bias_act(w_all, patches, b_vec, act=act, tm=tm)

    # pixel shuffle: (dy, dx, Cout, N, H, W) -> (Cout, N, 2H, 2W)
    out = out[:, :Cout, :M].reshape(2, 2, Cout, N, H, W)
    out = jnp.transpose(out, (2, 3, 4, 0, 5, 1))
    return out.reshape(Cout, N, 2 * H, 2 * W)


# ----------------------------------------------------------------------------
# Generator forward (Pallas) and pure-JAX reference
# ----------------------------------------------------------------------------
def make_generator_params(key, channels, noise_size, out_dim):
    cfg = [(noise_size, channels), (channels, channels // 2),
           (channels // 2, channels // 4), (channels // 4, channels // 8),
           (channels // 8, out_dim)]
    params = []
    for li, (cin, cout) in enumerate(cfg):
        kw_key, kb_key = jax.random.split(jax.random.fold_in(key, li))
        fan = cin * 4 * 4
        w = jax.random.normal(kw_key, (cin, cout, 4, 4), jnp.float32) / np.sqrt(fan)
        b = 0.01 * jax.random.normal(kb_key, (cout,), jnp.float32)
        params.append((w, b))   # only arrays -> safe to pass through jit
    return params


def generator_forward_pallas(x_nchw, params):
    # Layer strides/paddings are the static DCGAN spec: (1,0) then 4x (2,1).
    (w0, b0), *rest = params
    N = x_nchw.shape[0]
    x_cn = jnp.transpose(x_nchw.reshape(N, -1), (1, 0))            # (noise, N)
    h = _first_layer(x_cn, w0, b0)                                 # (C, N, 4, 4)
    for li, (w, b) in enumerate(rest):
        act = "tanh" if li == len(rest) - 1 else "leaky_relu"
        h = _upsample_layer(h, w, b, act)
    return jnp.transpose(h, (1, 0, 2, 3))                          # NCHW once


def _conv_transpose_ref(x, w_ct, bias, stride, padding):
    # ConvTranspose2d == conv over stride-dilated input with flipped kernel.
    w_conv = jnp.transpose(jnp.flip(w_ct, axis=(2, 3)), (1, 0, 2, 3))
    k = w_ct.shape[2]
    pad = k - 1 - padding
    out = jax.lax.conv_general_dilated(
        x.astype(jnp.bfloat16), w_conv.astype(jnp.bfloat16),
        window_strides=(1, 1), padding=((pad, pad), (pad, pad)),
        lhs_dilation=(stride, stride),
        dimension_numbers=("NCHW", "OIHW", "NCHW"),
        preferred_element_type=jnp.float32)
    return out + bias.reshape(1, -1, 1, 1)


def generator_forward_ref(x, params):
    strides = [1, 2, 2, 2, 2]
    pads = [0, 1, 1, 1, 1]
    h = x
    for li, (w, b) in enumerate(params):
        h = _conv_transpose_ref(h, w, b, strides[li], pads[li])
        if li == len(params) - 1:
            h = jnp.tanh(h)
        else:
            h = jnp.where(h >= 0.0, h, 0.2 * h)
    return h


if __name__ == "__main__":
    # small DCGAN config: batch=2, noise_size=16, channels=32, out_dim=3
    batch, noise_size, channels, out_dim = 2, 16, 32, 3
    key = jax.random.PRNGKey(0)
    xkey, pkey = jax.random.split(key)

    x = jax.random.normal(xkey, (batch, noise_size, 1, 1), jnp.float32)
    params = make_generator_params(pkey, channels, noise_size, out_dim)

    out = jax.block_until_ready(jax.jit(generator_forward_pallas)(x, params))
    assert out.shape == (batch, out_dim, 64, 64), out.shape

    ref = jax.block_until_ready(generator_forward_ref(x, params))
    np.testing.assert_allclose(np.asarray(out), np.asarray(ref),
                               rtol=2e-2, atol=2e-2)

    print("KERNEL_OK")
</pallas_src>

<mosaic_0001>
module attributes {stable_mosaic.version = 11 : i64} {
  func.func @_fused_matmul_kernel(%arg0: i32, %arg1: i32, %arg2: memref<1x512x16xbf16, #tpu.memory_space<vmem>>, %arg3: memref<1x16x128xbf16, #tpu.memory_space<vmem>>, %arg4: memref<512x1xf32, #tpu.memory_space<vmem>>, %arg5: memref<1x512x128xf32, #tpu.memory_space<vmem>>) attributes {dimension_semantics = [#tpu.dimension_semantics<parallel>, #tpu.dimension_semantics<parallel>], iteration_bounds = array<i64: 1, 1>, scalar_prefetch = 0 : i64, scratch_operands = 0 : i64, tpu.core_type = #tpu.core_type<tc>, window_params = [{transform_indices = @transform_0, window_bounds = array<i64: 1, 512, 16>}, {transform_indices = @transform_1, window_bounds = array<i64: 1, 16, 128>}, {pipeline_mode = #tpu.pipeline_mode<synchronous>, transform_indices = @transform_2, window_bounds = array<i64: 512, 1>}, {transform_indices = @transform_3, window_bounds = array<i64: 1, 512, 128>}]} {
    %c0 = arith.constant 0 : index
    %c0_0 = arith.constant 0 : index
    %c0_1 = arith.constant 0 : index
    %0 = vector.load %arg2[%c0, %c0_0, %c0_1] : memref<1x512x16xbf16, #tpu.memory_space<vmem>>, vector<1x512x16xbf16>
    %1 = vector.shape_cast %0 : vector<1x512x16xbf16> to vector<512x16xbf16>
    %c0_2 = arith.constant 0 : index
    %c0_3 = arith.constant 0 : index
    %c0_4 = arith.constant 0 : index
    %2 = vector.load %arg3[%c0_2, %c0_3, %c0_4] : memref<1x16x128xbf16, #tpu.memory_space<vmem>>, vector<1x16x128xbf16>
    %3 = vector.shape_cast %2 : vector<1x16x128xbf16> to vector<16x128xbf16>
    %cst = arith.constant dense<0.000000e+00> : vector<512x128xf32>
    %4 = tpu.matmul %1, %3, %cst {dimension_numbers = #tpu.dot_dimension_numbers<[1], [0], [0], [1], [0, 0, 1, 1], [], []>} : vector<512x16xbf16>, vector<16x128xbf16>, vector<512x128xf32> -> vector<512x128xf32>
    %c0_5 = arith.constant 0 : index
    %c0_6 = arith.constant 0 : index
    %5 = vector.load %arg4[%c0_5, %c0_6] : memref<512x1xf32, #tpu.memory_space<vmem>>, vector<512x1xf32>
    %6 = vector.broadcast %5 : vector<512x1xf32> to vector<512x128xf32>
    %7 = arith.addf %4, %6 : vector<512x128xf32>
    %cst_7 = arith.constant 0.000000e+00 : f32
    %8 = vector.broadcast %cst_7 : f32 to vector<512x128xf32>
    %9 = arith.cmpf oge, %7, %8 : vector<512x128xf32>
    %cst_8 = arith.constant 2.000000e-01 : f32
    %10 = vector.broadcast %cst_8 : f32 to vector<512x128xf32>
    %11 = arith.mulf %10, %7 : vector<512x128xf32>
    %12 = arith.select %9, %7, %11 : vector<512x128xi1>, vector<512x128xf32>
    %c0_9 = arith.constant 0 : index
    %c0_10 = arith.constant 0 : index
    %c0_11 = arith.constant 0 : index
    %13 = vector.load %arg5[%c0_9, %c0_10, %c0_11] : memref<1x512x128xf32, #tpu.memory_space<vmem>>, vector<1x512x128xf32>
    %14 = vector.shape_cast %13 : vector<1x512x128xf32> to vector<512x128xf32>
    %15 = vector.shape_cast %12 : vector<512x128xf32> to vector<1x512x128xf32>
    tpu.vector_store %arg5[%c0_9, %c0_10, %c0_11], %15 {strides = array<i32>} : memref<1x512x128xf32, #tpu.memory_space<vmem>>, vector<1x512x128xf32>,
    return
  }
  func.func @transform_0(%arg0: i32, %arg1: i32) -> (i32, i32, i32) {
    %c0_i32 = arith.constant 0 : i32
    %c0_i32_0 = arith.constant 0 : i32
    %c0_i32_1 = arith.constant 0 : i32
    return %arg0, %c0_i32, %c0_i32_0 : i32, i32, i32
  }
  func.func @transform_1(%arg0: i32, %arg1: i32) -> (i32, i32, i32) {
    %c0_i32 = arith.constant 0 : i32
    %c0_i32_0 = arith.constant 0 : i32
    return %arg0, %c0_i32, %arg1 : i32, i32, i32
  }
  func.func @transform_2(%arg0: i32, %arg1: i32) -> (i32, i32) {
    %c0_i32 = arith.constant 0 : i32
    %c0_i32_0 = arith.constant 0 : i32
    %c0_i32_1 = arith.constant 0 : i32
    return %c0_i32, %c0_i32_0 : i32, i32
  }
  func.func @transform_3(%arg0: i32, %arg1: i32) -> (i32, i32, i32) {
    %c0_i32 = arith.constant 0 : i32
    %c0_i32_0 = arith.constant 0 : i32
    return %arg0, %c0_i32, %arg1 : i32, i32, i32
  }
}

module attributes {stable_mosaic.version = 11 : i64} {
  func.func @_fused_matmul_kernel(%arg0: i32, %arg1: i32, %arg2: memref<1x16x128xbf16, #tpu.memory_space<vmem>>, %arg3: memref<1x128x128xbf16, #tpu.memory_space<vmem>>, %arg4: memref<16x1xf32, #tpu.memory_space<vmem>>, %arg5: memref<1x16x128xf32, #tpu.memory_space<vmem>>) attributes {dimension_semantics = [#tpu.dimension_semantics<parallel>, #tpu.dimension_semantics<parallel>], iteration_bounds = array<i64: 4, 1>, scalar_prefetch = 0 : i64, scratch_operands = 0 : i64, tpu.core_type = #tpu.core_type<tc>, window_params = [{transform_indices = @transform_0, window_bounds = array<i64: 1, 16, 128>}, {transform_indices = @transform_1, window_bounds = array<i64: 1, 128, 128>}, {pipeline_mode = #tpu.pipeline_mode<synchronous>, transform_indices = @transform_2, window_bounds = array<i64: 16, 1>}, {transform_indices = @transform_3, window_bounds = array<i64: 1, 16, 128>}]} {
    %c0 = arith.constant 0 : index
    %c0_0 = arith.constant 0 : index
    %c0_1 = arith.constant 0 : index
    %0 = vector.load %arg2[%c0, %c0_0, %c0_1] : memref<1x16x128xbf16, #tpu.memory_space<vmem>>, vector<1x16x128xbf16>
    %1 = vector.shape_cast %0 : vector<1x16x128xbf16> to vector<16x128xbf16>
    %c0_2 = arith.constant 0 : index
    %c0_3 = arith.constant 0 : index
    %c0_4 = arith.constant 0 : index
    %2 = vector.load %arg3[%c0_2, %c0_3, %c0_4] : memref<1x128x128xbf16, #tpu.memory_space<vmem>>, vector<1x128x128xbf16>
    %3 = vector.shape_cast %2 : vector<1x128x128xbf16> to vector<128x128xbf16>
    %cst = arith.constant dense<0.000000e+00> : vector<16x128xf32>
    %4 = tpu.matmul %1, %3, %cst {dimension_numbers = #tpu.dot_dimension_numbers<[1], [0], [0], [1], [0, 0, 1, 1], [], []>} : vector<16x128xbf16>, vector<128x128xbf16>, vector<16x128xf32> -> vector<16x128xf32>
    %c0_5 = arith.constant 0 : index
    %c0_6 = arith.constant 0 : index
    %5 = vector.load %arg4[%c0_5, %c0_6] : memref<16x1xf32, #tpu.memory_space<vmem>>, vector<16x1xf32>
    %6 = vector.broadcast %5 : vector<16x1xf32> to vector<16x128xf32>
    %7 = arith.addf %4, %6 : vector<16x128xf32>
    %cst_7 = arith.constant 0.000000e+00 : f32
    %8 = vector.broadcast %cst_7 : f32 to vector<16x128xf32>
    %9 = arith.cmpf oge, %7, %8 : vector<16x128xf32>
    %cst_8 = arith.constant 2.000000e-01 : f32
    %10 = vector.broadcast %cst_8 : f32 to vector<16x128xf32>
    %11 = arith.mulf %10, %7 : vector<16x128xf32>
    %12 = arith.select %9, %7, %11 : vector<16x128xi1>, vector<16x128xf32>
    %c0_9 = arith.constant 0 : index
    %c0_10 = arith.constant 0 : index
    %c0_11 = arith.constant 0 : index
    %13 = vector.load %arg5[%c0_9, %c0_10, %c0_11] : memref<1x16x128xf32, #tpu.memory_space<vmem>>, vector<1x16x128xf32>
    %14 = vector.shape_cast %13 : vector<1x16x128xf32> to vector<16x128xf32>
    %15 = vector.shape_cast %12 : vector<16x128xf32> to vector<1x16x128xf32>
    tpu.vector_store %arg5[%c0_9, %c0_10, %c0_11], %15 {strides = array<i32>} : memref<1x16x128xf32, #tpu.memory_space<vmem>>, vector<1x16x128xf32>,
    return
  }
  func.func @transform_0(%arg0: i32, %arg1: i32) -> (i32, i32, i32) {
    %c0_i32 = arith.constant 0 : i32
    %c0_i32_0 = arith.constant 0 : i32
    %c0_i32_1 = arith.constant 0 : i32
    return %arg0, %c0_i32, %c0_i32_0 : i32, i32, i32
  }
  func.func @transform_1(%arg0: i32, %arg1: i32) -> (i32, i32, i32) {
    %c0_i32 = arith.constant 0 : i32
    %c0_i32_0 = arith.constant 0 : i32
    return %arg0, %c0_i32, %arg1 : i32, i32, i32
  }
  func.func @transform_2(%arg0: i32, %arg1: i32) -> (i32, i32) {
    %c0_i32 = arith.constant 0 : i32
    %c0_i32_0 = arith.constant 0 : i32
    %c0_i32_1 = arith.constant 0 : i32
    return %c0_i32, %c0_i32_0 : i32, i32
  }
  func.func @transform_3(%arg0: i32, %arg1: i32) -> (i32, i32, i32) {
    %c0_i32 = arith.constant 0 : i32
    %c0_i32_0 = arith.constant 0 : i32
    return %arg0, %c0_i32, %arg1 : i32, i32, i32
  }
}

module attributes {stable_mosaic.version = 11 : i64} {
  func.func @_fused_matmul_kernel(%arg0: i32, %arg1: i32, %arg2: memref<1x8x64xbf16, #tpu.memory_space<vmem>>, %arg3: memref<1x64x128xbf16, #tpu.memory_space<vmem>>, %arg4: memref<8x1xf32, #tpu.memory_space<vmem>>, %arg5: memref<1x8x128xf32, #tpu.memory_space<vmem>>) attributes {dimension_semantics = [#tpu.dimension_semantics<parallel>, #tpu.dimension_semantics<parallel>], iteration_bounds = array<i64: 4, 1>, scalar_prefetch = 0 : i64, scratch_operands = 0 : i64, tpu.core_type = #tpu.core_type<tc>, window_params = [{transform_indices = @transform_0, window_bounds = array<i64: 1, 8, 64>}, {transform_indices = @transform_1, window_bounds = array<i64: 1, 64, 128>}, {pipeline_mode = #tpu.pipeline_mode<synchronous>, transform_indices = @transform_2, window_bounds = array<i64: 8, 1>}, {transform_indices = @transform_3, window_bounds = array<i64: 1, 8, 128>}]} {
    %c0 = arith.constant 0 : index
    %c0_0 = arith.constant 0 : index
    %c0_1 = arith.constant 0 : index
    %0 = vector.load %arg2[%c0, %c0_0, %c0_1] : memref<1x8x64xbf16, #tpu.memory_space<vmem>>, vector<1x8x64xbf16>
    %1 = vector.shape_cast %0 : vector<1x8x64xbf16> to vector<8x64xbf16>
    %c0_2 = arith.constant 0 : index
    %c0_3 = arith.constant 0 : index
    %c0_4 = arith.constant 0 : index
    %2 = vector.load %arg3[%c0_2, %c0_3, %c0_4] : memref<1x64x128xbf16, #tpu.memory_space<vmem>>, vector<1x64x128xbf16>
    %3 = vector.shape_cast %2 : vector<1x64x128xbf16> to vector<64x128xbf16>
    %cst = arith.constant dense<0.000000e+00> : vector<8x128xf32>
    %4 = tpu.matmul %1, %3, %cst {dimension_numbers = #tpu.dot_dimension_numbers<[1], [0], [0], [1], [0, 0, 1, 1], [], []>} : vector<8x64xbf16>, vector<64x128xbf16>, vector<8x128xf32> -> vector<8x128xf32>
    %c0_5 = arith.constant 0 : index
    %c0_6 = arith.constant 0 : index
    %5 = vector.load %arg4[%c0_5, %c0_6] : memref<8x1xf32, #tpu.memory_space<vmem>>, vector<8x1xf32>
    %6 = vector.broadcast %5 : vector<8x1xf32> to vector<8x128xf32>
    %7 = arith.addf %4, %6 : vector<8x128xf32>
    %cst_7 = arith.constant 0.000000e+00 : f32
    %8 = vector.broadcast %cst_7 : f32 to vector<8x128xf32>
    %9 = arith.cmpf oge, %7, %8 : vector<8x128xf32>
    %cst_8 = arith.constant 2.000000e-01 : f32
    %10 = vector.broadcast %cst_8 : f32 to vector<8x128xf32>
    %11 = arith.mulf %10, %7 : vector<8x128xf32>
    %12 = arith.select %9, %7, %11 : vector<8x128xi1>, vector<8x128xf32>
    %c0_9 = arith.constant 0 : index
    %c0_10 = arith.constant 0 : index
    %c0_11 = arith.constant 0 : index
    %13 = vector.load %arg5[%c0_9, %c0_10, %c0_11] : memref<1x8x128xf32, #tpu.memory_space<vmem>>, vector<1x8x128xf32>
    %14 = vector.shape_cast %13 : vector<1x8x128xf32> to vector<8x128xf32>
    %15 = vector.shape_cast %12 : vector<8x128xf32> to vector<1x8x128xf32>
    tpu.vector_store %arg5[%c0_9, %c0_10, %c0_11], %15 {strides = array<i32>} : memref<1x8x128xf32, #tpu.memory_space<vmem>>, vector<1x8x128xf32>,
    return
  }
  func.func @transform_0(%arg0: i32, %arg1: i32) -> (i32, i32, i32) {
    %c0_i32 = arith.constant 0 : i32
    %c0_i32_0 = arith.constant 0 : i32
    %c0_i32_1 = arith.constant 0 : i32
    return %arg0, %c0_i32, %c0_i32_0 : i32, i32, i32
  }
  func.func @transform_1(%arg0: i32, %arg1: i32) -> (i32, i32, i32) {
    %c0_i32 = arith.constant 0 : i32
    %c0_i32_0 = arith.constant 0 : i32
    return %arg0, %c0_i32, %arg1 : i32, i32, i32
  }
  func.func @transform_2(%arg0: i32, %arg1: i32) -> (i32, i32) {
    %c0_i32 = arith.constant 0 : i32
    %c0_i32_0 = arith.constant 0 : i32
    %c0_i32_1 = arith.constant 0 : i32
    return %c0_i32, %c0_i32_0 : i32, i32
  }
  func.func @transform_3(%arg0: i32, %arg1: i32) -> (i32, i32, i32) {
    %c0_i32 = arith.constant 0 : i32
    %c0_i32_0 = arith.constant 0 : i32
    return %arg0, %c0_i32, %arg1 : i32, i32, i32
  }
}

module attributes {stable_mosaic.version = 11 : i64} {
  func.func @_fused_matmul_kernel(%arg0: i32, %arg1: i32, %arg2: memref<1x8x32xbf16, #tpu.memory_space<vmem>>, %arg3: memref<1x32x512xbf16, #tpu.memory_space<vmem>>, %arg4: memref<8x1xf32, #tpu.memory_space<vmem>>, %arg5: memref<1x8x512xf32, #tpu.memory_space<vmem>>) attributes {dimension_semantics = [#tpu.dimension_semantics<parallel>, #tpu.dimension_semantics<parallel>], iteration_bounds = array<i64: 4, 1>, scalar_prefetch = 0 : i64, scratch_operands = 0 : i64, tpu.core_type = #tpu.core_type<tc>, window_params = [{transform_indices = @transform_0, window_bounds = array<i64: 1, 8, 32>}, {transform_indices = @transform_1, window_bounds = array<i64: 1, 32, 512>}, {pipeline_mode = #tpu.pipeline_mode<synchronous>, transform_indices = @transform_2, window_bounds = array<i64: 8, 1>}, {transform_indices = @transform_3, window_bounds = array<i64: 1, 8, 512>}]} {
    %c0 = arith.constant 0 : index
    %c0_0 = arith.constant 0 : index
    %c0_1 = arith.constant 0 : index
    %0 = vector.load %arg2[%c0, %c0_0, %c0_1] : memref<1x8x32xbf16, #tpu.memory_space<vmem>>, vector<1x8x32xbf16>
    %1 = vector.shape_cast %0 : vector<1x8x32xbf16> to vector<8x32xbf16>
    %c0_2 = arith.constant 0 : index
    %c0_3 = arith.constant 0 : index
    %c0_4 = arith.constant 0 : index
    %2 = vector.load %arg3[%c0_2, %c0_3, %c0_4] : memref<1x32x512xbf16, #tpu.memory_space<vmem>>, vector<1x32x512xbf16>
    %3 = vector.shape_cast %2 : vector<1x32x512xbf16> to vector<32x512xbf16>
    %cst = arith.constant dense<0.000000e+00> : vector<8x512xf32>
    %4 = tpu.matmul %1, %3, %cst {dimension_numbers = #tpu.dot_dimension_numbers<[1], [0], [0], [1], [0, 0, 1, 1], [], []>} : vector<8x32xbf16>, vector<32x512xbf16>, vector<8x512xf32> -> vector<8x512xf32>
    %c0_5 = arith.constant 0 : index
    %c0_6 = arith.constant 0 : index
    %5 = vector.load %arg4[%c0_5, %c0_6] : memref<8x1xf32, #tpu.memory_space<vmem>>, vector<8x1xf32>
    %6 = vector.broadcast %5 : vector<8x1xf32> to vector<8x512xf32>
    %7 = arith.addf %4, %6 : vector<8x512xf32>
    %cst_7 = arith.constant 0.000000e+00 : f32
    %8 = vector.broadcast %cst_7 : f32 to vector<8x512xf32>
    %9 = arith.cmpf oge, %7, %8 : vector<8x512xf32>
    %cst_8 = arith.constant 2.000000e-01 : f32
    %10 = vector.broadcast %cst_8 : f32 to vector<8x512xf32>
    %11 = arith.mulf %10, %7 : vector<8x512xf32>
    %12 = arith.select %9, %7, %11 : vector<8x512xi1>, vector<8x512xf32>
    %c0_9 = arith.constant 0 : index
    %c0_10 = arith.constant 0 : index
    %c0_11 = arith.constant 0 : index
    %13 = vector.load %arg5[%c0_9, %c0_10, %c0_11] : memref<1x8x512xf32, #tpu.memory_space<vmem>>, vector<1x8x512xf32>
    %14 = vector.shape_cast %13 : vector<1x8x512xf32> to vector<8x512xf32>
    %15 = vector.shape_cast %12 : vector<8x512xf32> to vector<1x8x512xf32>
    tpu.vector_store %arg5[%c0_9, %c0_10, %c0_11], %15 {strides = array<i32>} : memref<1x8x512xf32, #tpu.memory_space<vmem>>, vector<1x8x512xf32>,
    return
  }
  func.func @transform_0(%arg0: i32, %arg1: i32) -> (i32, i32, i32) {
    %c0_i32 = arith.constant 0 : i32
    %c0_i32_0 = arith.constant 0 : i32
    %c0_i32_1 = arith.constant 0 : i32
    return %arg0, %c0_i32, %c0_i32_0 : i32, i32, i32
  }
  func.func @transform_1(%arg0: i32, %arg1: i32) -> (i32, i32, i32) {
    %c0_i32 = arith.constant 0 : i32
    %c0_i32_0 = arith.constant 0 : i32
    return %arg0, %c0_i32, %arg1 : i32, i32, i32
  }
  func.func @transform_2(%arg0: i32, %arg1: i32) -> (i32, i32) {
    %c0_i32 = arith.constant 0 : i32
    %c0_i32_0 = arith.constant 0 : i32
    %c0_i32_1 = arith.constant 0 : i32
    return %c0_i32, %c0_i32_0 : i32, i32
  }
  func.func @transform_3(%arg0: i32, %arg1: i32) -> (i32, i32, i32) {
    %c0_i32 = arith.constant 0 : i32
    %c0_i32_0 = arith.constant 0 : i32
    return %arg0, %c0_i32, %arg1 : i32, i32, i32
  }
}

module attributes {stable_mosaic.version = 11 : i64} {
  func.func @_fused_matmul_kernel(%arg0: i32, %arg1: i32, %arg2: memref<1x8x16xbf16, #tpu.memory_space<vmem>>, %arg3: memref<1x16x1024xbf16, #tpu.memory_space<vmem>>, %arg4: memref<8x1xf32, #tpu.memory_space<vmem>>, %arg5: memref<1x8x1024xf32, #tpu.memory_space<vmem>>) attributes {dimension_semantics = [#tpu.dimension_semantics<parallel>, #tpu.dimension_semantics<parallel>], iteration_bounds = array<i64: 4, 2>, scalar_prefetch = 0 : i64, scratch_operands = 0 : i64, tpu.core_type = #tpu.core_type<tc>, window_params = [{transform_indices = @transform_0, window_bounds = array<i64: 1, 8, 16>}, {transform_indices = @transform_1, window_bounds = array<i64: 1, 16, 1024>}, {pipeline_mode = #tpu.pipeline_mode<synchronous>, transform_indices = @transform_2, window_bounds = array<i64: 8, 1>}, {transform_indices = @transform_3, window_bounds = array<i64: 1, 8, 1024>}]} {
    %c0 = arith.constant 0 : index
    %c0_0 = arith.constant 0 : index
    %c0_1 = arith.constant 0 : index
    %0 = vector.load %arg2[%c0, %c0_0, %c0_1] : memref<1x8x16xbf16, #tpu.memory_space<vmem>>, vector<1x8x16xbf16>
    %1 = vector.shape_cast %0 : vector<1x8x16xbf16> to vector<8x16xbf16>
    %c0_2 = arith.constant 0 : index
    %c0_3 = arith.constant 0 : index
    %c0_4 = arith.constant 0 : index
    %2 = vector.load %arg3[%c0_2, %c0_3, %c0_4] : memref<1x16x1024xbf16, #tpu.memory_space<vmem>>, vector<1x16x1024xbf16>
    %3 = vector.shape_cast %2 : vector<1x16x1024xbf16> to vector<16x1024xbf16>
    %cst = arith.constant dense<0.000000e+00> : vector<8x1024xf32>
    %4 = tpu.matmul %1, %3, %cst {dimension_numbers = #tpu.dot_dimension_numbers<[1], [0], [0], [1], [0, 0, 1, 1], [], []>} : vector<8x16xbf16>, vector<16x1024xbf16>, vector<8x1024xf32> -> vector<8x1024xf32>
    %c0_5 = arith.constant 0 : index
    %c0_6 = arith.constant 0 : index
    %5 = vector.load %arg4[%c0_5, %c0_6] : memref<8x1xf32, #tpu.memory_space<vmem>>, vector<8x1xf32>
    %6 = vector.broadcast %5 : vector<8x1xf32> to vector<8x1024xf32>
    %7 = arith.addf %4, %6 : vector<8x1024xf32>
    %8 = math.tanh %7 : vector<8x1024xf32>
    %c0_7 = arith.constant 0 : index
    %c0_8 = arith.constant 0 : index
    %c0_9 = arith.constant 0 : index
    %9 = vector.load %arg5[%c0_7, %c0_8, %c0_9] : memref<1x8x1024xf32, #tpu.memory_space<vmem>>, vector<1x8x1024xf32>
    %10 = vector.shape_cast %9 : vector<1x8x1024xf32> to vector<8x1024xf32>
    %11 = vector.shape_cast %8 : vector<8x1024xf32> to vector<1x8x1024xf32>
    tpu.vector_store %arg5[%c0_7, %c0_8, %c0_9], %11 {strides = array<i32>} : memref<1x8x1024xf32, #tpu.memory_space<vmem>>, vector<1x8x1024xf32>,
    return
  }
  func.func @transform_0(%arg0: i32, %arg1: i32) -> (i32, i32, i32) {
    %c0_i32 = arith.constant 0 : i32
    %c0_i32_0 = arith.constant 0 : i32
    %c0_i32_1 = arith.constant 0 : i32
    return %arg0, %c0_i32, %c0_i32_0 : i32, i32, i32
  }
  func.func @transform_1(%arg0: i32, %arg1: i32) -> (i32, i32, i32) {
    %c0_i32 = arith.constant 0 : i32
    %c0_i32_0 = arith.constant 0 : i32
    return %arg0, %c0_i32, %arg1 : i32, i32, i32
  }
  func.func @transform_2(%arg0: i32, %arg1: i32) -> (i32, i32) {
    %c0_i32 = arith.constant 0 : i32
    %c0_i32_0 = arith.constant 0 : i32
    %c0_i32_1 = arith.constant 0 : i32
    return %c0_i32, %c0_i32_0 : i32, i32
  }
  func.func @transform_3(%arg0: i32, %arg1: i32) -> (i32, i32, i32) {
    %c0_i32 = arith.constant 0 : i32
    %c0_i32_0 = arith.constant 0 : i32
    return %arg0, %c0_i32, %arg1 : i32, i32, i32
  }
}

</mosaic_0001>

<llo_original>
// kernel: generator_forward_pallas.5
$region0: #{generator_forward_pallas.5}
  #allocation0 [shape = 'u32[]', space=smem, size = 0x4, offset = 0x4, fixed_abs, tag = 'smem constant byte address 0x4 - core index']
  #allocation1 [shape = 'u32[144,128]{1,0:T(1,128)}', space=vmem, size = 0x12000, scoped, tag = 'internal scratch']
  %s0 = inlined_call_operand.vmem [shape: bf16[1,512,16], index: 0, kind: input, shape index: {}]
  %s1 = inlined_call_operand.vmem [shape: bf16[1,16,128], index: 1, kind: input, shape index: {}]
  %s2 = inlined_call_operand.vmem [shape: f32[512,1], index: 2, kind: input, shape index: {}]
  %s3 = inlined_call_operand.vmem [shape: f32[1,512,128], index: 3, kind: output, shape index: {}]
  %s4 = sld [smem:[#allocation0]]
  $region22: #{generator_forward_pallas.5} parent=0
    _
  %s6 = ssub.s32 1, %s4
  %s7 = scalar_select 0, %s6, %s4
  // Predicated region
  $region2: #{generator_forward_pallas.5} parent=0 // pred_check
    _
  $region3: #{generator_forward_pallas.5} parent=0 // pred_check_branch
    %9 = sbr.rel (0) target = $region5
  $region4: #{generator_forward_pallas.5} parent=0 // pred_region
    _
  $region5: #{generator_forward_pallas.5} parent=0 // pred_fallthru
    _
  // Predicated region
  $region6: #{generator_forward_pallas.5} parent=0 // pred_check
    _
  $region7: #{generator_forward_pallas.5} parent=0 // pred_check_branch
    %11 = sbr.rel (0) target = $region9
  $region8: #{generator_forward_pallas.5} parent=0 // pred_region
    _
  $region9: #{generator_forward_pallas.5} parent=0 // pred_fallthru
    _
  // Predicated region
  $region10: #{generator_forward_pallas.5} parent=0 // pred_check
    _
  $region11: #{generator_forward_pallas.5} parent=0 // pred_check_branch
    %13 = sbr.rel (0) target = $region13
  $region12: #{generator_forward_pallas.5} parent=0 // pred_region
    _
  $region13: #{generator_forward_pallas.5} parent=0 // pred_fallthru
    _
  %v15 = vld [vmem:[%s0] sm:$0xf]
  %v16 = vld [vmem:[%s0 + $0x4] sm:$0xf]
  %v17 = vld [vmem:[%s0 + $0x8] sm:$0xf]
  %v18 = vld [vmem:[%s0 + $0xc] sm:$0xf]
  %v19 = vld [vmem:[%s0 + $0x10] sm:$0xf]
  %v20 = vld [vmem:[%s0 + $0x14] sm:$0xf]
  %v21 = vld [vmem:[%s0 + $0x18] sm:$0xf]
  %v22 = vld [vmem:[%s0 + $0x1c] sm:$0xf]
  %v23 = vld [vmem:[%s0 + $0x20] sm:$0xf]
  %v24 = vld [vmem:[%s0 + $0x24] sm:$0xf]
  %v25 = vld [vmem:[%s0 + $0x28] sm:$0xf]
  %v26 = vld [vmem:[%s0 + $0x2c] sm:$0xf]
  %v27 = vld [vmem:[%s0 + $0x30] sm:$0xf]
  %v28 = vld [vmem:[%s0 + $0x34] sm:$0xf]
  %v29 = vld [vmem:[%s0 + $0x38] sm:$0xf]
  %v30 = vld [vmem:[%s0 + $0x3c] sm:$0xf]
  %v31 = vld [vmem:[%s0 + $0x40] sm:$0xf]
  %v32 = vld [vmem:[%s0 + $0x44] sm:$0xf]
  %v33 = vld [vmem:[%s0 + $0x48] sm:$0xf]
  %v34 = vld [vmem:[%s0 + $0x4c] sm:$0xf]
  %v35 = vld [vmem:[%s0 + $0x50] sm:$0xf]
  %v36 = vld [vmem:[%s0 + $0x54] sm:$0xf]
  %v37 = vld [vmem:[%s0 + $0x58] sm:$0xf]
  %v38 = vld [vmem:[%s0 + $0x5c] sm:$0xf]
  %v39 = vld [vmem:[%s0 + $0x60] sm:$0xf]
  %v40 = vld [vmem:[%s0 + $0x64] sm:$0xf]
  %v41 = vld [vmem:[%s0 + $0x68] sm:$0xf]
  %v42 = vld [vmem:[%s0 + $0x6c] sm:$0xf]
  %v43 = vld [vmem:[%s0 + $0x70] sm:$0xf]
  %v44 = vld [vmem:[%s0 + $0x74] sm:$0xf]
  %v45 = vld [vmem:[%s0 + $0x78] sm:$0xf]
  %v46 = vld [vmem:[%s0 + $0x7c] sm:$0xf]
  %v47 = vld [vmem:[%s0 + $0x80] sm:$0xf]
  %v48 = vld [vmem:[%s0 + $0x84] sm:$0xf]
  %v49 = vld [vmem:[%s0 + $0x88] sm:$0xf]
  %v50 = vld [vmem:[%s0 + $0x8c] sm:$0xf]
  %v51 = vld [vmem:[%s0 + $0x90] sm:$0xf]
  %v52 = vld [vmem:[%s0 + $0x94] sm:$0xf]
  %v53 = vld [vmem:[%s0 + $0x98] sm:$0xf]
  %v54 = vld [vmem:[%s0 + $0x9c] sm:$0xf]
  %v55 = vld [vmem:[%s0 + $0xa0] sm:$0xf]
  %v56 = vld [vmem:[%s0 + $0xa4] sm:$0xf]
  %v57 = vld [vmem:[%s0 + $0xa8] sm:$0xf]
  %v58 = vld [vmem:[%s0 + $0xac] sm:$0xf]
  %v59 = vld [vmem:[%s0 + $0xb0] sm:$0xf]
  %v60 = vld [vmem:[%s0 + $0xb4] sm:$0xf]
  %v61 = vld [vmem:[%s0 + $0xb8] sm:$0xf]
  %v62 = vld [vmem:[%s0 + $0xbc] sm:$0xf]
  %v63 = vld [vmem:[%s0 + $0xc0] sm:$0xf]
  %v64 = vld [vmem:[%s0 + $0xc4] sm:$0xf]
  %v65 = vld [vmem:[%s0 + $0xc8] sm:$0xf]
  %v66 = vld [vmem:[%s0 + $0xcc] sm:$0xf]
  %v67 = vld [vmem:[%s0 + $0xd0] sm:$0xf]
  %v68 = vld [vmem:[%s0 + $0xd4] sm:$0xf]
  %v69 = vld [vmem:[%s0 + $0xd8] sm:$0xf]
  %v70 = vld [vmem:[%s0 + $0xdc] sm:$0xf]
  %v71 = vld [vmem:[%s0 + $0xe0] sm:$0xf]
  %v72 = vld [vmem:[%s0 + $0xe4] sm:$0xf]
  %v73 = vld [vmem:[%s0 + $0xe8] sm:$0xf]
  %v74 = vld [vmem:[%s0 + $0xec] sm:$0xf]
  %v75 = vld [vmem:[%s0 + $0xf0] sm:$0xf]
  %v76 = vld [vmem:[%s0 + $0xf4] sm:$0xf]
  %v77 = vld [vmem:[%s0 + $0xf8] sm:$0xf]
  %v78 = vld [vmem:[%s0 + $0xfc] sm:$0xf]
  %v79 = vld [vmem:[%s1] sm:$0xf]
  %v80 = vld [vmem:[%s1 + $0x4] sm:$0xf]
  %v81 = vld [vmem:[%s2] sm:$0xff]
  %v82 = vld [vmem:[%s2 + $0x8] sm:$0xff]
  %v83 = vld [vmem:[%s2 + $0x10] sm:$0xff]
  %v84 = vld [vmem:[%s2 + $0x18] sm:$0xff]
  %v85 = vld [vmem:[%s2 + $0x20] sm:$0xff]
  %v86 = vld [vmem:[%s2 + $0x28] sm:$0xff]
  %v87 = vld [vmem:[%s2 + $0x30] sm:$0xff]
  %v88 = vld [vmem:[%s2 + $0x38] sm:$0xff]
  %v89 = vld [vmem:[%s2 + $0x40] sm:$0xff]
  %v90 = vld [vmem:[%s2 + $0x48] sm:$0xff]
  %v91 = vld [vmem:[%s2 + $0x50] sm:$0xff]
  %v92 = vld [vmem:[%s2 + $0x58] sm:$0xff]
  %v93 = vld [vmem:[%s2 + $0x60] sm:$0xff]
  %v94 = vld [vmem:[%s2 + $0x68] sm:$0xff]
  %v95 = vld [vmem:[%s2 + $0x70] sm:$0xff]
  %v96 = vld [vmem:[%s2 + $0x78] sm:$0xff]
  %v97 = vld [vmem:[%s2 + $0x80] sm:$0xff]
  %v98 = vld [vmem:[%s2 + $0x88] sm:$0xff]
  %v99 = vld [vmem:[%s2 + $0x90] sm:$0xff]
  %v100 = vld [vmem:[%s2 + $0x98] sm:$0xff]
  %v101 = vld [vmem:[%s2 + $0xa0] sm:$0xff]
  %v102 = vld [vmem:[%s2 + $0xa8] sm:$0xff]
  %v103 = vld [vmem:[%s2 + $0xb0] sm:$0xff]
  %v104 = vld [vmem:[%s2 + $0xb8] sm:$0xff]
  %v105 = vld [vmem:[%s2 + $0xc0] sm:$0xff]
  %v106 = vld [vmem:[%s2 + $0xc8] sm:$0xff]
  %v107 = vld [vmem:[%s2 + $0xd0] sm:$0xff]
  %v108 = vld [vmem:[%s2 + $0xd8] sm:$0xff]
  %v109 = vld [vmem:[%s2 + $0xe0] sm:$0xff]
  %v110 = vld [vmem:[%s2 + $0xe8] sm:$0xff]
  %v111 = vld [vmem:[%s2 + $0xf0] sm:$0xff]
  %v112 = vld [vmem:[%s2 + $0xf8] sm:$0xff]
  %v113 = vld [vmem:[%s2 + $0x100] sm:$0xff]
  %v114 = vld [vmem:[%s2 + $0x108] sm:$0xff]
  %v115 = vld [vmem:[%s2 + $0x110] sm:$0xff]
  %v116 = vld [vmem:[%s2 + $0x118] sm:$0xff]
  %v117 = vld [vmem:[%s2 + $0x120] sm:$0xff]
  %v118 = vld [vmem:[%s2 + $0x128] sm:$0xff]
  %v119 = vld [vmem:[%s2 + $0x130] sm:$0xff]
  %v120 = vld [vmem:[%s2 + $0x138] sm:$0xff]
  %v121 = vld [vmem:[%s2 + $0x140] sm:$0xff]
  %v122 = vld [vmem:[%s2 + $0x148] sm:$0xff]
  %v123 = vld [vmem:[%s2 + $0x150] sm:$0xff]
  %v124 = vld [vmem:[%s2 + $0x158] sm:$0xff]
  %v125 = vld [vmem:[%s2 + $0x160] sm:$0xff]
  %v126 = vld [vmem:[%s2 + $0x168] sm:$0xff]
  %v127 = vld [vmem:[%s2 + $0x170] sm:$0xff]
  %v128 = vld [vmem:[%s2 + $0x178] sm:$0xff]
  %v129 = vld [vmem:[%s2 + $0x180] sm:$0xff]
  %v130 = vld [vmem:[%s2 + $0x188] sm:$0xff]
  %v131 = vld [vmem:[%s2 + $0x190] sm:$0xff]
  %v132 = vld [vmem:[%s2 + $0x198] sm:$0xff]
  %v133 = vld [vmem:[%s2 + $0x1a0] sm:$0xff]
  %v134 = vld [vmem:[%s2 + $0x1a8] sm:$0xff]
  %v135 = vld [vmem:[%s2 + $0x1b0] sm:$0xff]
  %v136 = vld [vmem:[%s2 + $0x1b8] sm:$0xff]
  %v137 = vld [vmem:[%s2 + $0x1c0] sm:$0xff]
  %v138 = vld [vmem:[%s2 + $0x1c8] sm:$0xff]
  %v139 = vld [vmem:[%s2 + $0x1d0] sm:$0xff]
  %v140 = vld [vmem:[%s2 + $0x1d8] sm:$0xff]
  %v141 = vld [vmem:[%s2 + $0x1e0] sm:$0xff]
  %v142 = vld [vmem:[%s2 + $0x1e8] sm:$0xff]
  %v143 = vld [vmem:[%s2 + $0x1f0] sm:$0xff]
  %v144 = vld [vmem:[%s2 + $0x1f8] sm:$0xff]
  %146 = vset.pattern.permute.xlu0 0
  %147 = vperm.xlu0 %146, %v81
  %v148 = vpop.permute.xlu0 %147
  %151 = vset.pattern.permute.xlu0 0
  %152 = vperm.xlu0 %151, %v82
  %v153 = vpop.permute.xlu0 %152
  %156 = vset.pattern.permute.xlu0 0
  %157 = vperm.xlu0 %156, %v83
  %v158 = vpop.permute.xlu0 %157
  %161 = vset.pattern.permute.xlu0 0
  %162 = vperm.xlu0 %161, %v84
  %v163 = vpop.permute.xlu0 %162
  %166 = vset.pattern.permute.xlu0 0
  %167 = vperm.xlu0 %166, %v85
  %v168 = vpop.permute.xlu0 %167
  %171 = vset.pattern.permute.xlu0 0
  %172 = vperm.xlu0 %171, %v86
  %v173 = vpop.permute.xlu0 %172
  %176 = vset.pattern.permute.xlu0 0
  %177 = vperm.xlu0 %176, %v87
  %v178 = vpop.permute.xlu0 %177
  %181 = vset.pattern.permute.xlu0 0
  %182 = vperm.xlu0 %181, %v88
  %v183 = vpop.permute.xlu0 %182
  %186 = vset.pattern.permute.xlu0 0
  %187 = vperm.xlu0 %186, %v89
  %v188 = vpop.permute.xlu0 %187
  %191 = vset.pattern.permute.xlu0 0
  %192 = vperm.xlu0 %191, %v90
  %v193 = vpop.permute.xlu0 %192
  %196 = vset.pattern.permute.xlu0 0
  %197 = vperm.xlu0 %196, %v91
  %v198 = vpop.permute.xlu0 %197
  %201 = vset.pattern.permute.xlu0 0
  %202 = vperm.xlu0 %201, %v92
  %v203 = vpop.permute.xlu0 %202
  %206 = vset.pattern.permute.xlu0 0
  %207 = vperm.xlu0 %206, %v93
  %v208 = vpop.permute.xlu0 %207
  %211 = vset.pattern.permute.xlu0 0
  %212 = vperm.xlu0 %211, %v94
  %v213 = vpop.permute.xlu0 %212
  %216 = vset.pattern.permute.xlu0 0
  %217 = vperm.xlu0 %216, %v95
  %v218 = vpop.permute.xlu0 %217
  %221 = vset.pattern.permute.xlu0 0
  %222 = vperm.xlu0 %221, %v96
  %v223 = vpop.permute.xlu0 %222
  %226 = vset.pattern.permute.xlu0 0
  %227 = vperm.xlu0 %226, %v97
  %v228 = vpop.permute.xlu0 %227
  %231 = vset.pattern.permute.xlu0 0
  %232 = vperm.xlu0 %231, %v98
  %v233 = vpop.permute.xlu0 %232
  %236 = vset.pattern.permute.xlu0 0
  %237 = vperm.xlu0 %236, %v99
  %v238 = vpop.permute.xlu0 %237
  %241 = vset.pattern.permute.xlu0 0
  %242 = vperm.xlu0 %241, %v100
  %v243 = vpop.permute.xlu0 %242
  %246 = vset.pattern.permute.xlu0 0
  %247 = vperm.xlu0 %246, %v101
  %v248 = vpop.permute.xlu0 %247
  %251 = vset.pattern.permute.xlu0 0
  %252 = vperm.xlu0 %251, %v102
  %v253 = vpop.permute.xlu0 %252
  %256 = vset.pattern.permute.xlu0 0
  %257 = vperm.xlu0 %256, %v103
  %v258 = vpop.permute.xlu0 %257
  %261 = vset.pattern.permute.xlu0 0
  %262 = vperm.xlu0 %261, %v104
  %v263 = vpop.permute.xlu0 %262
  %266 = vset.pattern.permute.xlu0 0
  %267 = vperm.xlu0 %266, %v105
  %v268 = vpop.permute.xlu0 %267
  %271 = vset.pattern.permute.xlu0 0
  %272 = vperm.xlu0 %271, %v106
  %v273 = vpop.permute.xlu0 %272
  %276 = vset.pattern.permute.xlu0 0
  %277 = vperm.xlu0 %276, %v107
  %v278 = vpop.permute.xlu0 %277
  %281 = vset.pattern.permute.xlu0 0
  %282 = vperm.xlu0 %281, %v108
  %v283 = vpop.permute.xlu0 %282
  %286 = vset.pattern.permute.xlu0 0
  %287 = vperm.xlu0 %286, %v109
  %v288 = vpop.permute.xlu0 %287
  %291 = vset.pattern.permute.xlu0 0
  %292 = vperm.xlu0 %291, %v110
  %v293 = vpop.permute.xlu0 %292
  %296 = vset.pattern.permute.xlu0 0
  %297 = vperm.xlu0 %296, %v111
  %v298 = vpop.permute.xlu0 %297
  %301 = vset.pattern.permute.xlu0 0
  %302 = vperm.xlu0 %301, %v112
  %v303 = vpop.permute.xlu0 %302
  %306 = vset.pattern.permute.xlu0 0
  %307 = vperm.xlu0 %306, %v113
  %v308 = vpop.permute.xlu0 %307
  %311 = vset.pattern.permute.xlu0 0
  %312 = vperm.xlu0 %311, %v114
  %v313 = vpop.permute.xlu0 %312
  %316 = vset.pattern.permute.xlu0 0
  %317 = vperm.xlu0 %316, %v115
  %v318 = vpop.permute.xlu0 %317
  %321 = vset.pattern.permute.xlu0 0
  %322 = vperm.xlu0 %321, %v116
  %v323 = vpop.permute.xlu0 %322
  %326 = vset.pattern.permute.xlu0 0
  %327 = vperm.xlu0 %326, %v117
  %v328 = vpop.permute.xlu0 %327
  %331 = vset.pattern.permute.xlu0 0
  %332 = vperm.xlu0 %331, %v118
  %v333 = vpop.permute.xlu0 %332
  %336 = vset.pattern.permute.xlu0 0
  %337 = vperm.xlu0 %336, %v119
  %v338 = vpop.permute.xlu0 %337
  %341 = vset.pattern.permute.xlu0 0
  %342 = vperm.xlu0 %341, %v120
  %v343 = vpop.permute.xlu0 %342
  %346 = vset.pattern.permute.xlu0 0
  %347 = vperm.xlu0 %346, %v121
  %v348 = vpop.permute.xlu0 %347
  %351 = vset.pattern.permute.xlu0 0
  %352 = vperm.xlu0 %351, %v122
  %v353 = vpop.permute.xlu0 %352
  %356 = vset.pattern.permute.xlu0 0
  %357 = vperm.xlu0 %356, %v123
  %v358 = vpop.permute.xlu0 %357
  %361 = vset.pattern.permute.xlu0 0
  %362 = vperm.xlu0 %361, %v124
  %v363 = vpop.permute.xlu0 %362
  %366 = vset.pattern.permute.xlu0 0
  %367 = vperm.xlu0 %366, %v125
  %v368 = vpop.permute.xlu0 %367
  %371 = vset.pattern.permute.xlu0 0
  %372 = vperm.xlu0 %371, %v126
  %v373 = vpop.permute.xlu0 %372
  %376 = vset.pattern.permute.xlu0 0
  %377 = vperm.xlu0 %376, %v127
  %v378 = vpop.permute.xlu0 %377
  %381 = vset.pattern.permute.xlu0 0
  %382 = vperm.xlu0 %381, %v128
  %v383 = vpop.permute.xlu0 %382
  %386 = vset.pattern.permute.xlu0 0
  %387 = vperm.xlu0 %386, %v129
  %v388 = vpop.permute.xlu0 %387
  %391 = vset.pattern.permute.xlu0 0
  %392 = vperm.xlu0 %391, %v130
  %v393 = vpop.permute.xlu0 %392
  %396 = vset.pattern.permute.xlu0 0
  %397 = vperm.xlu0 %396, %v131
  %v398 = vpop.permute.xlu0 %397
  %401 = vset.pattern.permute.xlu0 0
  %402 = vperm.xlu0 %401, %v132
  %v403 = vpop.permute.xlu0 %402
  %406 = vset.pattern.permute.xlu0 0
  %407 = vperm.xlu0 %406, %v133
  %v408 = vpop.permute.xlu0 %407
  %411 = vset.pattern.permute.xlu0 0
  %412 = vperm.xlu0 %411, %v134
  %v413 = vpop.permute.xlu0 %412
  %416 = vset.pattern.permute.xlu0 0
  %417 = vperm.xlu0 %416, %v135
  %v418 = vpop.permute.xlu0 %417
  %421 = vset.pattern.permute.xlu0 0
  %422 = vperm.xlu0 %421, %v136
  %v423 = vpop.permute.xlu0 %422
  %426 = vset.pattern.permute.xlu0 0
  %427 = vperm.xlu0 %426, %v137
  %v428 = vpop.permute.xlu0 %427
  %431 = vset.pattern.permute.xlu0 0
  %432 = vperm.xlu0 %431, %v138
  %v433 = vpop.permute.xlu0 %432
  %436 = vset.pattern.permute.xlu0 0
  %437 = vperm.xlu0 %436, %v139
  %v438 = vpop.permute.xlu0 %437
  %441 = vset.pattern.permute.xlu0 0
  %442 = vperm.xlu0 %441, %v140
  %v443 = vpop.permute.xlu0 %442
  %446 = vset.pattern.permute.xlu0 0
  %447 = vperm.xlu0 %446, %v141
  %v448 = vpop.permute.xlu0 %447
  %451 = vset.pattern.permute.xlu0 0
  %452 = vperm.xlu0 %451, %v142
  %v453 = vpop.permute.xlu0 %452
  %456 = vset.pattern.permute.xlu0 0
  %457 = vperm.xlu0 %456, %v143
  %v458 = vpop.permute.xlu0 %457
  %461 = vset.pattern.permute.xlu0 0
  %462 = vperm.xlu0 %461, %v144
  %v463 = vpop.permute.xlu0 %462
  %v529 = vunpack.c.l.b16 %v15
  %v530 = vunpack.c.l.b16 %v16
  %v531 = vunpack.c.l.b16 %v17
  %v532 = vunpack.c.l.b16 %v18
  %v533 = vunpack.c.l.b16 %v19
  %v534 = vunpack.c.l.b16 %v20
  %v535 = vunpack.c.l.b16 %v21
  %v536 = vunpack.c.l.b16 %v22
  %v537 = vunpack.c.l.b16 %v23
  %v538 = vunpack.c.l.b16 %v24
  %v539 = vunpack.c.l.b16 %v25
  %v540 = vunpack.c.l.b16 %v26
  %v541 = vunpack.c.l.b16 %v27
  %v542 = vunpack.c.l.b16 %v28
  %v543 = vunpack.c.l.b16 %v29
  %v544 = vunpack.c.l.b16 %v30
  %v545 = vunpack.c.l.b16 %v31
  %v546 = vunpack.c.l.b16 %v32
  %v547 = vunpack.c.l.b16 %v33
  %v548 = vunpack.c.l.b16 %v34
  %v549 = vunpack.c.l.b16 %v35
  %v550 = vunpack.c.l.b16 %v36
  %v551 = vunpack.c.l.b16 %v37
  %v552 = vunpack.c.l.b16 %v38
  %v553 = vunpack.c.l.b16 %v39
  %v554 = vunpack.c.l.b16 %v40
  %v555 = vunpack.c.l.b16 %v41
  %v556 = vunpack.c.l.b16 %v42
  %v557 = vunpack.c.l.b16 %v43
  %v558 = vunpack.c.l.b16 %v44
  %v559 = vunpack.c.l.b16 %v45
  %v560 = vunpack.c.l.b16 %v46
  %v561 = vunpack.c.l.b16 %v47
  %v562 = vunpack.c.l.b16 %v48
  %v563 = vunpack.c.l.b16 %v49
  %v564 = vunpack.c.l.b16 %v50
  %v565 = vunpack.c.l.b16 %v51
  %v566 = vunpack.c.l.b16 %v52
  %v567 = vunpack.c.l.b16 %v53
  %v568 = vunpack.c.l.b16 %v54
  %v569 = vunpack.c.l.b16 %v55
  %v570 = vunpack.c.l.b16 %v56
  %v571 = vunpack.c.l.b16 %v57
  %v572 = vunpack.c.l.b16 %v58
  %v573 = vunpack.c.l.b16 %v59
  %v574 = vunpack.c.l.b16 %v60
  %v575 = vunpack.c.l.b16 %v61
  %v576 = vunpack.c.l.b16 %v62
  %v577 = vunpack.c.l.b16 %v63
  %v578 = vunpack.c.l.b16 %v64
  %v579 = vunpack.c.l.b16 %v65
  %v580 = vunpack.c.l.b16 %v66
  %v581 = vunpack.c.l.b16 %v67
  %v582 = vunpack.c.l.b16 %v68
  %v583 = vunpack.c.l.b16 %v69
  %v584 = vunpack.c.l.b16 %v70
  %v585 = vunpack.c.l.b16 %v71
  %v586 = vunpack.c.l.b16 %v72
  %v587 = vunpack.c.l.b16 %v73
  %v588 = vunpack.c.l.b16 %v74
  %v589 = vunpack.c.l.b16 %v75
  %v590 = vunpack.c.l.b16 %v76
  %v591 = vunpack.c.l.b16 %v77
  %v592 = vunpack.c.l.b16 %v78
  %v593 = vpack.c.b16 %v530, %v529
  %v594 = vpack.c.b16 %v532, %v531
  %v595 = vpack.c.b16 %v534, %v533
  %v596 = vpack.c.b16 %v536, %v535
  %v597 = vpack.c.b16 %v538, %v537
  %v598 = vpack.c.b16 %v540, %v539
  %v599 = vpack.c.b16 %v542, %v541
  %v600 = vpack.c.b16 %v544, %v543
  %v601 = vpack.c.b16 %v546, %v545
  %v602 = vpack.c.b16 %v548, %v547
  %v603 = vpack.c.b16 %v550, %v549
  %v604 = vpack.c.b16 %v552, %v551
  %v605 = vpack.c.b16 %v554, %v553
  %v606 = vpack.c.b16 %v556, %v555
  %v607 = vpack.c.b16 %v558, %v557
  %v608 = vpack.c.b16 %v560, %v559
  %v609 = vpack.c.b16 %v562, %v561
  %v610 = vpack.c.b16 %v564, %v563
  %v611 = vpack.c.b16 %v566, %v565
  %v612 = vpack.c.b16 %v568, %v567
  %v613 = vpack.c.b16 %v570, %v569
  %v614 = vpack.c.b16 %v572, %v571
  %v615 = vpack.c.b16 %v574, %v573
  %v616 = vpack.c.b16 %v576, %v575
  %v617 = vpack.c.b16 %v578, %v577
  %v618 = vpack.c.b16 %v580, %v579
  %v619 = vpack.c.b16 %v582, %v581
  %v620 = vpack.c.b16 %v584, %v583
  %v621 = vpack.c.b16 %v586, %v585
  %v622 = vpack.c.b16 %v588, %v587
  %v623 = vpack.c.b16 %v590, %v589
  %v624 = vpack.c.b16 %v592, %v591
  %v627 = vunpack.c.l.b16 %v79
  %v628 = vunpack.c.l.b16 %v80
  %v629 = vpack.c.b16 %v628, %v627
  %vm631 = vcmask 130048
  %v633 = vsel %vm631, %v593, 0
  %v636 = vsel %vm631, %v594, 0
  %v639 = vsel %vm631, %v595, 0
  %v642 = vsel %vm631, %v596, 0
  %v645 = vsel %vm631, %v597, 0
  %v648 = vsel %vm631, %v598, 0
  %v651 = vsel %vm631, %v599, 0
  %v654 = vsel %vm631, %v600, 0
  %v657 = vsel %vm631, %v601, 0
  %v660 = vsel %vm631, %v602, 0
  %v663 = vsel %vm631, %v603, 0
  %v666 = vsel %vm631, %v604, 0
  %v669 = vsel %vm631, %v605, 0
  %v672 = vsel %vm631, %v606, 0
  %v675 = vsel %vm631, %v607, 0
  %v678 = vsel %vm631, %v608, 0
  %v681 = vsel %vm631, %v609, 0
  %v684 = vsel %vm631, %v610, 0
  %v687 = vsel %vm631, %v611, 0
  %v690 = vsel %vm631, %v612, 0
  %v693 = vsel %vm631, %v613, 0
  %v696 = vsel %vm631, %v614, 0
  %v699 = vsel %vm631, %v615, 0
  %v702 = vsel %vm631, %v616, 0
  %v705 = vsel %vm631, %v617, 0
  %v708 = vsel %vm631, %v618, 0
  %v711 = vsel %vm631, %v619, 0
  %v714 = vsel %vm631, %v620, 0
  %v717 = vsel %vm631, %v621, 0
  %v720 = vsel %vm631, %v622, 0
  %v723 = vsel %vm631, %v623, 0
  %v726 = vsel %vm631, %v624, 0
  %728 = vmatprep.subr.bf16.mxu0 0
  %729 = vmatpush1.bf16.msra.mxu0 %v629
  %730 = vmatprep.subr.bf16.mxu0 0
  %731 = vmatpush1.bf16.msra.mxu0 0
  %732 = vmatprep.subr.bf16.mxu0 0
  %733 = vmatpush1.bf16.msra.mxu0 0
  %734 = vmatprep.subr.bf16.mxu0 0
  %735 = vmatpush1.bf16.msra.mxu0 0
  %736 = vmatprep.subr.bf16.mxu0 0
  %737 = vmatpush1.bf16.msra.mxu0 0
  %738 = vmatprep.subr.bf16.mxu0 0
  %739 = vmatpush1.bf16.msra.mxu0 0
  %740 = vmatprep.subr.bf16.mxu0 0
  %741 = vmatpush1.bf16.msra.mxu0 0
  %742 = vmatprep.subr.bf16.mxu0 0
  %743 = vmatpush1.bf16.msra.mxu0 0
  %744 = vmatprep.subr.bf16.mxu0 0
  %745 = vmatpush1.bf16.msra.mxu0 0
  %746 = vmatprep.subr.bf16.mxu0 0
  %747 = vmatpush1.bf16.msra.mxu0 0
  %748 = vmatprep.subr.bf16.mxu0 0
  %749 = vmatpush1.bf16.msra.mxu0 0
  %750 = vmatprep.subr.bf16.mxu0 0
  %751 = vmatpush1.bf16.msra.mxu0 0
  %752 = vmatprep.subr.bf16.mxu0 0
  %753 = vmatpush1.bf16.msra.mxu0 0
  %754 = vmatprep.subr.bf16.mxu0 0
  %755 = vmatpush1.bf16.msra.mxu0 0
  %756 = vmatprep.subr.bf16.mxu0 0
  %757 = vmatpush1.bf16.msra.mxu0 0
  %758 = vmatprep.subr.bf16.mxu0 0
  %759 = vmatpush1.bf16.msra.mxu0 0
  %760 = vmatprep.mubr.bf16.mxu0 0
  %761 = vmatmul.mubr.bf16.gmra.mrb[0].mxu0 %v633
  %v762 = vpop.f32.mrb[0].mxu0
  %v763 = vadd.f32 %v148, %v762
  %v764 = vpop.f32.mrb[0].mxu0
  %v765 = vpop.f32.mrb[0].mxu0
  %v766 = vadd.f32 %v153, %v765
  %v767 = vpop.f32.mrb[0].mxu0
  %768 = vmatprep.mubr.bf16.mxu0 0
  %769 = vmatmul.mubr.bf16.gmra.mrb[0].mxu0 %v636
  %v770 = vpop.f32.mrb[0].mxu0
  %v771 = vadd.f32 %v158, %v770
  %v772 = vpop.f32.mrb[0].mxu0
  %v773 = vpop.f32.mrb[0].mxu0
  %v774 = vadd.f32 %v163, %v773
  %v775 = vpop.f32.mrb[0].mxu0
  %776 = vmatprep.mubr.bf16.mxu0 0
  %777 = vmatmul.mubr.bf16.gmra.mrb[0].mxu0 %v639
  %v778 = vpop.f32.mrb[0].mxu0
  %v779 = vadd.f32 %v168, %v778
  %v780 = vpop.f32.mrb[0].mxu0
  %v781 = vpop.f32.mrb[0].mxu0
  %v782 = vadd.f32 %v173, %v781
  %v783 = vpop.f32.mrb[0].mxu0
  %784 = vmatprep.mubr.bf16.mxu0 0
  %785 = vmatmul.mubr.bf16.gmra.mrb[0].mxu0 %v642
  %v786 = vpop.f32.mrb[0].mxu0
  %v787 = vadd.f32 %v178, %v786
  %v788 = vpop.f32.mrb[0].mxu0
  %v789 = vpop.f32.mrb[0].mxu0
  %v790 = vadd.f32 %v183, %v789
  %v791 = vpop.f32.mrb[0].mxu0
  %792 = vmatprep.mubr.bf16.mxu0 0
  %793 = vmatmul.mubr.bf16.gmra.mrb[0].mxu0 %v645
  %v794 = vpop.f32.mrb[0].mxu0
  %v795 = vadd.f32 %v188, %v794
  %v796 = vpop.f32.mrb[0].mxu0
  %v797 = vpop.f32.mrb[0].mxu0
  %v798 = vadd.f32 %v193, %v797
  %v799 = vpop.f32.mrb[0].mxu0
  %800 = vmatprep.mubr.bf16.mxu0 0
  %801 = vmatmul.mubr.bf16.gmra.mrb[0].mxu0 %v648
  %v802 = vpop.f32.mrb[0].mxu0
  %v803 = vadd.f32 %v198, %v802
  %v804 = vpop.f32.mrb[0].mxu0
  %v805 = vpop.f32.mrb[0].mxu0
  %v806 = vadd.f32 %v203, %v805
  %v807 = vpop.f32.mrb[0].mxu0
  %808 = vmatprep.mubr.bf16.mxu0 0
  %809 = vmatmul.mubr.bf16.gmra.mrb[0].mxu0 %v651
  %v810 = vpop.f32.mrb[0].mxu0
  %v811 = vadd.f32 %v208, %v810
  %v812 = vpop.f32.mrb[0].mxu0
  %v813 = vpop.f32.mrb[0].mxu0
  %v814 = vadd.f32 %v213, %v813
  %v815 = vpop.f32.mrb[0].mxu0
  %816 = vmatprep.mubr.bf16.mxu0 0
  %817 = vmatmul.mubr.bf16.gmra.mrb[0].mxu0 %v654
  %v818 = vpop.f32.mrb[0].mxu0
  %v819 = vadd.f32 %v218, %v818
  %v820 = vpop.f32.mrb[0].mxu0
  %v821 = vpop.f32.mrb[0].mxu0
  %v822 = vadd.f32 %v223, %v821
  %v823 = vpop.f32.mrb[0].mxu0
  %824 = vmatprep.mubr.bf16.mxu0 0
  %825 = vmatmul.mubr.bf16.gmra.mrb[0].mxu0 %v657
  %v826 = vpop.f32.mrb[0].mxu0
  %v827 = vadd.f32 %v228, %v826
  %v828 = vpop.f32.mrb[0].mxu0
  %v829 = vpop.f32.mrb[0].mxu0
  %v830 = vadd.f32 %v233, %v829
  %v831 = vpop.f32.mrb[0].mxu0
  %832 = vmatprep.mubr.bf16.mxu0 0
  %833 = vmatmul.mubr.bf16.gmra.mrb[0].mxu0 %v660
  %v834 = vpop.f32.mrb[0].mxu0
  %v835 = vadd.f32 %v238, %v834
  %v836 = vpop.f32.mrb[0].mxu0
  %v837 = vpop.f32.mrb[0].mxu0
  %v838 = vadd.f32 %v243, %v837
  %v839 = vpop.f32.mrb[0].mxu0
  %840 = vmatprep.mubr.bf16.mxu0 0
  %841 = vmatmul.mubr.bf16.gmra.mrb[0].mxu0 %v663
  %v842 = vpop.f32.mrb[0].mxu0
  %v843 = vadd.f32 %v248, %v842
  %v844 = vpop.f32.mrb[0].mxu0
  %v845 = vpop.f32.mrb[0].mxu0
  %v846 = vadd.f32 %v253, %v845
  %v847 = vpop.f32.mrb[0].mxu0
  %848 = vmatprep.mubr.bf16.mxu0 0
  %849 = vmatmul.mubr.bf16.gmra.mrb[0].mxu0 %v666
  %v850 = vpop.f32.mrb[0].mxu0
  %v851 = vadd.f32 %v258, %v850
  %v852 = vpop.f32.mrb[0].mxu0
  %v853 = vpop.f32.mrb[0].mxu0
  %v854 = vadd.f32 %v263, %v853
  %v855 = vpop.f32.mrb[0].mxu0
  %856 = vmatprep.mubr.bf16.mxu0 0
  %857 = vmatmul.mubr.bf16.gmra.mrb[0].mxu0 %v669
  %v858 = vpop.f32.mrb[0].mxu0
  %v859 = vadd.f32 %v268, %v858
  %v860 = vpop.f32.mrb[0].mxu0
  %v861 = vpop.f32.mrb[0].mxu0
  %v862 = vadd.f32 %v273, %v861
  %v863 = vpop.f32.mrb[0].mxu0
  %864 = vmatprep.mubr.bf16.mxu0 0
  %865 = vmatmul.mubr.bf16.gmra.mrb[0].mxu0 %v672
  %v866 = vpop.f32.mrb[0].mxu0
  %v867 = vadd.f32 %v278, %v866
  %v868 = vpop.f32.mrb[0].mxu0
  %v869 = vpop.f32.mrb[0].mxu0
  %v870 = vadd.f32 %v283, %v869
  %v871 = vpop.f32.mrb[0].mxu0
  %872 = vmatprep.mubr.bf16.mxu0 0
  %873 = vmatmul.mubr.bf16.gmra.mrb[0].mxu0 %v675
  %v874 = vpop.f32.mrb[0].mxu0
  %v875 = vadd.f32 %v288, %v874
  %v876 = vpop.f32.mrb[0].mxu0
  %v877 = vpop.f32.mrb[0].mxu0
  %v878 = vadd.f32 %v293, %v877
  %v879 = vpop.f32.mrb[0].mxu0
  %880 = vmatprep.mubr.bf16.mxu0 0
  %881 = vmatmul.mubr.bf16.gmra.mrb[0].mxu0 %v678
  %v882 = vpop.f32.mrb[0].mxu0
  %v883 = vadd.f32 %v298, %v882
  %v884 = vpop.f32.mrb[0].mxu0
  %v885 = vpop.f32.mrb[0].mxu0
  %v886 = vadd.f32 %v303, %v885
  %v887 = vpop.f32.mrb[0].mxu0
  %888 = vmatprep.mubr.bf16.mxu0 0
  %889 = vmatmul.mubr.bf16.gmra.mrb[0].mxu0 %v681
  %v890 = vpop.f32.mrb[0].mxu0
  %v891 = vadd.f32 %v308, %v890
  %v892 = vpop.f32.mrb[0].mxu0
  %v893 = vpop.f32.mrb[0].mxu0
  %v894 = vadd.f32 %v313, %v893
  %v895 = vpop.f32.mrb[0].mxu0
  %896 = vmatprep.mubr.bf16.mxu0 0
  %897 = vmatmul.mubr.bf16.gmra.mrb[0].mxu0 %v684
  %v898 = vpop.f32.mrb[0].mxu0
  %v899 = vadd.f32 %v318, %v898
  %v900 = vpop.f32.mrb[0].mxu0
  %v901 = vpop.f32.mrb[0].mxu0
  %v902 = vadd.f32 %v323, %v901
  %v903 = vpop.f32.mrb[0].mxu0
  %904 = vmatprep.mubr.bf16.mxu0 0
  %905 = vmatmul.mubr.bf16.gmra.mrb[0].mxu0 %v687
  %v906 = vpop.f32.mrb[0].mxu0
  %v907 = vadd.f32 %v328, %v906
  %v908 = vpop.f32.mrb[0].mxu0
  %v909 = vpop.f32.mrb[0].mxu0
  %v910 = vadd.f32 %v333, %v909
  %v911 = vpop.f32.mrb[0].mxu0
  %912 = vmatprep.mubr.bf16.mxu0 0
  %913 = vmatmul.mubr.bf16.gmra.mrb[0].mxu0 %v690
  %v914 = vpop.f32.mrb[0].mxu0
  %v915 = vadd.f32 %v338, %v914
  %v916 = vpop.f32.mrb[0].mxu0
  %v917 = vpop.f32.mrb[0].mxu0
  %v918 = vadd.f32 %v343, %v917
  %v919 = vpop.f32.mrb[0].mxu0
  %920 = vmatprep.mubr.bf16.mxu0 0
  %921 = vmatmul.mubr.bf16.gmra.mrb[0].mxu0 %v693
  %v922 = vpop.f32.mrb[0].mxu0
  %v923 = vadd.f32 %v348, %v922
  %v924 = vpop.f32.mrb[0].mxu0
  %v925 = vpop.f32.mrb[0].mxu0
  %v926 = vadd.f32 %v353, %v925
  %v927 = vpop.f32.mrb[0].mxu0
  %928 = vmatprep.mubr.bf16.mxu0 0
  %929 = vmatmul.mubr.bf16.gmra.mrb[0].mxu0 %v696
  %v930 = vpop.f32.mrb[0].mxu0
  %v931 = vadd.f32 %v358, %v930
  %v932 = vpop.f32.mrb[0].mxu0
  %v933 = vpop.f32.mrb[0].mxu0
  %v934 = vadd.f32 %v363, %v933
  %v935 = vpop.f32.mrb[0].mxu0
  %936 = vmatprep.mubr.bf16.mxu0 0
  %937 = vmatmul.mubr.bf16.gmra.mrb[0].mxu0 %v699
  %v938 = vpop.f32.mrb[0].mxu0
  %v939 = vadd.f32 %v368, %v938
  %v940 = vpop.f32.mrb[0].mxu0
  %v941 = vpop.f32.mrb[0].mxu0
  %v942 = vadd.f32 %v373, %v941
  %v943 = vpop.f32.mrb[0].mxu0
  %944 = vmatprep.mubr.bf16.mxu0 0
  %945 = vmatmul.mubr.bf16.gmra.mrb[0].mxu0 %v702
  %v946 = vpop.f32.mrb[0].mxu0
  %v947 = vadd.f32 %v378, %v946
  %v948 = vpop.f32.mrb[0].mxu0
  %v949 = vpop.f32.mrb[0].mxu0
  %v950 = vadd.f32 %v383, %v949
  %v951 = vpop.f32.mrb[0].mxu0
  %952 = vmatprep.mubr.bf16.mxu0 0
  %953 = vmatmul.mubr.bf16.gmra.mrb[0].mxu0 %v705
  %v954 = vpop.f32.mrb[0].mxu0
  %v955 = vadd.f32 %v388, %v954
  %v956 = vpop.f32.mrb[0].mxu0
  %v957 = vpop.f32.mrb[0].mxu0
  %v958 = vadd.f32 %v393, %v957
  %v959 = vpop.f32.mrb[0].mxu0
  %960 = vmatprep.mubr.bf16.mxu0 0
  %961 = vmatmul.mubr.bf16.gmra.mrb[0].mxu0 %v708
  %v962 = vpop.f32.mrb[0].mxu0
  %v963 = vadd.f32 %v398, %v962
  %v964 = vpop.f32.mrb[0].mxu0
  %v965 = vpop.f32.mrb[0].mxu0
  %v966 = vadd.f32 %v403, %v965
  %v967 = vpop.f32.mrb[0].mxu0
  %968 = vmatprep.mubr.bf16.mxu0 0
  %969 = vmatmul.mubr.bf16.gmra.mrb[0].mxu0 %v711
  %v970 = vpop.f32.mrb[0].mxu0
  %v971 = vadd.f32 %v408, %v970
  %v972 = vpop.f32.mrb[0].mxu0
  %v973 = vpop.f32.mrb[0].mxu0
  %v974 = vadd.f32 %v413, %v973
  %v975 = vpop.f32.mrb[0].mxu0
  %976 = vmatprep.mubr.bf16.mxu0 0
  %977 = vmatmul.mubr.bf16.gmra.mrb[0].mxu0 %v714
  %v978 = vpop.f32.mrb[0].mxu0
  %v979 = vadd.f32 %v418, %v978
  %v980 = vpop.f32.mrb[0].mxu0
  %v981 = vpop.f32.mrb[0].mxu0
  %v982 = vadd.f32 %v423, %v981
  %v983 = vpop.f32.mrb[0].mxu0
  %984 = vmatprep.mubr.bf16.mxu0 0
  %985 = vmatmul.mubr.bf16.gmra.mrb[0].mxu0 %v717
  %v986 = vpop.f32.mrb[0].mxu0
  %v987 = vadd.f32 %v428, %v986
  %v988 = vpop.f32.mrb[0].mxu0
  %v989 = vpop.f32.mrb[0].mxu0
  %v990 = vadd.f32 %v433, %v989
  %v991 = vpop.f32.mrb[0].mxu0
  %992 = vmatprep.mubr.bf16.mxu0 0
  %993 = vmatmul.mubr.bf16.gmra.mrb[0].mxu0 %v720
  %v994 = vpop.f32.mrb[0].mxu0
  %v995 = vadd.f32 %v438, %v994
  %v996 = vpop.f32.mrb[0].mxu0
  %v997 = vpop.f32.mrb[0].mxu0
  %v998 = vadd.f32 %v443, %v997
  %v999 = vpop.f32.mrb[0].mxu0
  %1000 = vmatprep.mubr.bf16.mxu0 0
  %1001 = vmatmul.mubr.bf16.gmra.mrb[0].mxu0 %v723
  %v1002 = vpop.f32.mrb[0].mxu0
  %v1003 = vadd.f32 %v448, %v1002
  %v1004 = vpop.f32.mrb[0].mxu0
  %v1005 = vpop.f32.mrb[0].mxu0
  %v1006 = vadd.f32 %v453, %v1005
  %v1007 = vpop.f32.mrb[0].mxu0
  %1008 = vmatprep.mubr.bf16.mxu0 0
  %1009 = vmatmul.mubr.bf16.gmra.mrb[0].mxu0 %v726
  %v1010 = vpop.f32.mrb[0].mxu0
  %v1011 = vadd.f32 %v458, %v1010
  %v1012 = vpop.f32.mrb[0].mxu0
  %v1013 = vpop.f32.mrb[0].mxu0
  %v1014 = vadd.f32 %v463, %v1013
  %v1015 = vpop.f32.mrb[0].mxu0
  %1016 = vdwg.mxu0
  %vm1017 = vcmp.ge.f32.partialorder %v763, 0.0
  %vm1018 = vcmp.ge.f32.partialorder %v766, 0.0
  %vm1019 = vcmp.ge.f32.partialorder %v771, 0.0
  %vm1020 = vcmp.ge.f32.partialorder %v774, 0.0
  %vm1021 = vcmp.ge.f32.partialorder %v779, 0.0
  %vm1022 = vcmp.ge.f32.partialorder %v782, 0.0
  %vm1023 = vcmp.ge.f32.partialorder %v787, 0.0
  %vm1024 = vcmp.ge.f32.partialorder %v790, 0.0
  %vm1025 = vcmp.ge.f32.partialorder %v795, 0.0
  %vm1026 = vcmp.ge.f32.partialorder %v798, 0.0
  %vm1027 = vcmp.ge.f32.partialorder %v803, 0.0
  %vm1028 = vcmp.ge.f32.partialorder %v806, 0.0
  %vm1029 = vcmp.ge.f32.partialorder %v811, 0.0
  %vm1030 = vcmp.ge.f32.partialorder %v814, 0.0
  %vm1031 = vcmp.ge.f32.partialorder %v819, 0.0
  %vm1032 = vcmp.ge.f32.partialorder %v822, 0.0
  %vm1033 = vcmp.ge.f32.partialorder %v827, 0.0
  %vm1034 = vcmp.ge.f32.partialorder %v830, 0.0
  %vm1035 = vcmp.ge.f32.partialorder %v835, 0.0
  %vm1036 = vcmp.ge.f32.partialorder %v838, 0.0
  %vm1037 = vcmp.ge.f32.partialorder %v843, 0.0
  %vm1038 = vcmp.ge.f32.partialorder %v846, 0.0
  %vm1039 = vcmp.ge.f32.partialorder %v851, 0.0
  %vm1040 = vcmp.ge.f32.partialorder %v854, 0.0
  %vm1041 = vcmp.ge.f32.partialorder %v859, 0.0
  %vm1042 = vcmp.ge.f32.partialorder %v862, 0.0
  %vm1043 = vcmp.ge.f32.partialorder %v867, 0.0
  %vm1044 = vcmp.ge.f32.partialorder %v870, 0.0
  %vm1045 = vcmp.ge.f32.partialorder %v875, 0.0
  %vm1046 = vcmp.ge.f32.partialorder %v878, 0.0
  %vm1047 = vcmp.ge.f32.partialorder %v883, 0.0
  %vm1048 = vcmp.ge.f32.partialorder %v886, 0.0
  %vm1049 = vcmp.ge.f32.partialorder %v891, 0.0
  %vm1050 = vcmp.ge.f32.partialorder %v894, 0.0
  %vm1051 = vcmp.ge.f32.partialorder %v899, 0.0
  %vm1052 = vcmp.ge.f32.partialorder %v902, 0.0
  %vm1053 = vcmp.ge.f32.partialorder %v907, 0.0
  %vm1054 = vcmp.ge.f32.partialorder %v910, 0.0
  %vm1055 = vcmp.ge.f32.partialorder %v915, 0.0
  %vm1056 = vcmp.ge.f32.partialorder %v918, 0.0
  %vm1057 = vcmp.ge.f32.partialorder %v923, 0.0
  %vm1058 = vcmp.ge.f32.partialorder %v926, 0.0
  %vm1059 = vcmp.ge.f32.partialorder %v931, 0.0
  %vm1060 = vcmp.ge.f32.partialorder %v934, 0.0
  %vm1061 = vcmp.ge.f32.partialorder %v939, 0.0
  %vm1062 = vcmp.ge.f32.partialorder %v942, 0.0
  %vm1063 = vcmp.ge.f32.partialorder %v947, 0.0
  %vm1064 = vcmp.ge.f32.partialorder %v950, 0.0
  %vm1065 = vcmp.ge.f32.partialorder %v955, 0.0
  %vm1066 = vcmp.ge.f32.partialorder %v958, 0.0
  %vm1067 = vcmp.ge.f32.partialorder %v963, 0.0
  %vm1068 = vcmp.ge.f32.partialorder %v966, 0.0
  %vm1069 = vcmp.ge.f32.partialorder %v971, 0.0
  %vm1070 = vcmp.ge.f32.partialorder %v974, 0.0
  %vm1071 = vcmp.ge.f32.partialorder %v979, 0.0
  %vm1072 = vcmp.ge.f32.partialorder %v982, 0.0
  %vm1073 = vcmp.ge.f32.partialorder %v987, 0.0
  %vm1074 = vcmp.ge.f32.partialorder %v990, 0.0
  %vm1075 = vcmp.ge.f32.partialorder %v995, 0.0
  %vm1076 = vcmp.ge.f32.partialorder %v998, 0.0
  %vm1077 = vcmp.ge.f32.partialorder %v1003, 0.0
  %vm1078 = vcmp.ge.f32.partialorder %v1006, 0.0
  %vm1079 = vcmp.ge.f32.partialorder %v1011, 0.0
  %vm1080 = vcmp.ge.f32.partialorder %v1014, 0.0
  %v1081 = vmul.f32 %v763, 0.2
  %v1082 = vmul.f32 %v766, 0.2
  %v1083 = vmul.f32 %v771, 0.2
  %v1084 = vmul.f32 %v774, 0.2
  %v1085 = vmul.f32 %v779, 0.2
  %v1086 = vmul.f32 %v782, 0.2
  %v1087 = vmul.f32 %v787, 0.2
  %v1088 = vmul.f32 %v790, 0.2
  %v1089 = vmul.f32 %v795, 0.2
  %v1090 = vmul.f32 %v798, 0.2
  %v1091 = vmul.f32 %v803, 0.2
  %v1092 = vmul.f32 %v806, 0.2
  %v1093 = vmul.f32 %v811, 0.2
  %v1094 = vmul.f32 %v814, 0.2
  %v1095 = vmul.f32 %v819, 0.2
  %v1096 = vmul.f32 %v822, 0.2
  %v1097 = vmul.f32 %v827, 0.2
  %v1098 = vmul.f32 %v830, 0.2
  %v1099 = vmul.f32 %v835, 0.2
  %v1100 = vmul.f32 %v838, 0.2
  %v1101 = vmul.f32 %v843, 0.2
  %v1102 = vmul.f32 %v846, 0.2
  %v1103 = vmul.f32 %v851, 0.2
  %v1104 = vmul.f32 %v854, 0.2
  %v1105 = vmul.f32 %v859, 0.2
  %v1106 = vmul.f32 %v862, 0.2
  %v1107 = vmul.f32 %v867, 0.2
  %v1108 = vmul.f32 %v870, 0.2
  %v1109 = vmul.f32 %v875, 0.2
  %v1110 = vmul.f32 %v878, 0.2
  %v1111 = vmul.f32 %v883, 0.2
  %v1112 = vmul.f32 %v886, 0.2
  %v1113 = vmul.f32 %v891, 0.2
  %v1114 = vmul.f32 %v894, 0.2
  %v1115 = vmul.f32 %v899, 0.2
  %v1116 = vmul.f32 %v902, 0.2
  %v1117 = vmul.f32 %v907, 0.2
  %v1118 = vmul.f32 %v910, 0.2
  %v1119 = vmul.f32 %v915, 0.2
  %v1120 = vmul.f32 %v918, 0.2
  %v1121 = vmul.f32 %v923, 0.2
  %v1122 = vmul.f32 %v926, 0.2
  %v1123 = vmul.f32 %v931, 0.2
  %v1124 = vmul.f32 %v934, 0.2
  %v1125 = vmul.f32 %v939, 0.2
  %v1126 = vmul.f32 %v942, 0.2
  %v1127 = vmul.f32 %v947, 0.2
  %v1128 = vmul.f32 %v950, 0.2
  %v1129 = vmul.f32 %v955, 0.2
  %v1130 = vmul.f32 %v958, 0.2
  %v1131 = vmul.f32 %v963, 0.2
  %v1132 = vmul.f32 %v966, 0.2
  %v1133 = vmul.f32 %v971, 0.2
  %v1134 = vmul.f32 %v974, 0.2
  %v1135 = vmul.f32 %v979, 0.2
  %v1136 = vmul.f32 %v982, 0.2
  %v1137 = vmul.f32 %v987, 0.2
  %v1138 = vmul.f32 %v990, 0.2
  %v1139 = vmul.f32 %v995, 0.2
  %v1140 = vmul.f32 %v998, 0.2
  %v1141 = vmul.f32 %v1003, 0.2
  %v1142 = vmul.f32 %v1006, 0.2
  %v1143 = vmul.f32 %v1011, 0.2
  %v1144 = vmul.f32 %v1014, 0.2
  %v1145 = vsel %vm1017, %v763, %v1081
  %v1146 = vsel %vm1018, %v766, %v1082
  %v1147 = vsel %vm1019, %v771, %v1083
  %v1148 = vsel %vm1020, %v774, %v1084
  %v1149 = vsel %vm1021, %v779, %v1085
  %v1150 = vsel %vm1022, %v782, %v1086
  %v1151 = vsel %vm1023, %v787, %v1087
  %v1152 = vsel %vm1024, %v790, %v1088
  %v1153 = vsel %vm1025, %v795, %v1089
  %v1154 = vsel %vm1026, %v798, %v1090
  %v1155 = vsel %vm1027, %v803, %v1091
  %v1156 = vsel %vm1028, %v806, %v1092
  %v1157 = vsel %vm1029, %v811, %v1093
  %v1158 = vsel %vm1030, %v814, %v1094
  %v1159 = vsel %vm1031, %v819, %v1095
  %v1160 = vsel %vm1032, %v822, %v1096
  %v1161 = vsel %vm1033, %v827, %v1097
  %v1162 = vsel %vm1034, %v830, %v1098
  %v1163 = vsel %vm1035, %v835, %v1099
  %v1164 = vsel %vm1036, %v838, %v1100
  %v1165 = vsel %vm1037, %v843, %v1101
  %v1166 = vsel %vm1038, %v846, %v1102
  %v1167 = vsel %vm1039, %v851, %v1103
  %v1168 = vsel %vm1040, %v854, %v1104
  %v1169 = vsel %vm1041, %v859, %v1105
  %v1170 = vsel %vm1042, %v862, %v1106
  %v1171 = vsel %vm1043, %v867, %v1107
  %v1172 = vsel %vm1044, %v870, %v1108
  %v1173 = vsel %vm1045, %v875, %v1109
  %v1174 = vsel %vm1046, %v878, %v1110
  %v1175 = vsel %vm1047, %v883, %v1111
  %v1176 = vsel %vm1048, %v886, %v1112
  %v1177 = vsel %vm1049, %v891, %v1113
  %v1178 = vsel %vm1050, %v894, %v1114
  %v1179 = vsel %vm1051, %v899, %v1115
  %v1180 = vsel %vm1052, %v902, %v1116
  %v1181 = vsel %vm1053, %v907, %v1117
  %v1182 = vsel %vm1054, %v910, %v1118
  %v1183 = vsel %vm1055, %v915, %v1119
  %v1184 = vsel %vm1056, %v918, %v1120
  %v1185 = vsel %vm1057, %v923, %v1121
  %v1186 = vsel %vm1058, %v926, %v1122
  %v1187 = vsel %vm1059, %v931, %v1123
  %v1188 = vsel %vm1060, %v934, %v1124
  %v1189 = vsel %vm1061, %v939, %v1125
  %v1190 = vsel %vm1062, %v942, %v1126
  %v1191 = vsel %vm1063, %v947, %v1127
  %v1192 = vsel %vm1064, %v950, %v1128
  %v1193 = vsel %vm1065, %v955, %v1129
  %v1194 = vsel %vm1066, %v958, %v1130
  %v1195 = vsel %vm1067, %v963, %v1131
  %v1196 = vsel %vm1068, %v966, %v1132
  %v1197 = vsel %vm1069, %v971, %v1133
  %v1198 = vsel %vm1070, %v974, %v1134
  %v1199 = vsel %vm1071, %v979, %v1135
  %v1200 = vsel %vm1072, %v982, %v1136
  %v1201 = vsel %vm1073, %v987, %v1137
  %v1202 = vsel %vm1074, %v990, %v1138
  %v1203 = vsel %vm1075, %v995, %v1139
  %v1204 = vsel %vm1076, %v998, %v1140
  %v1205 = vsel %vm1077, %v1003, %v1141
  %v1206 = vsel %vm1078, %v1006, %v1142
  %v1207 = vsel %vm1079, %v1011, %v1143
  %v1208 = vsel %vm1080, %v1014, %v1144
  %1209 = vst [vmem:[%s3] sm:$0xff] %v1145
  %1210 = vst [vmem:[%s3 + $0x8] sm:$0xff] %v1146
  %1211 = vst [vmem:[%s3 + $0x10] sm:$0xff] %v1147
  %1212 = vst [vmem:[%s3 + $0x18] sm:$0xff] %v1148
  %1213 = vst [vmem:[%s3 + $0x20] sm:$0xff] %v1149
  %1214 = vst [vmem:[%s3 + $0x28] sm:$0xff] %v1150
  %1215 = vst [vmem:[%s3 + $0x30] sm:$0xff] %v1151
  %1216 = vst [vmem:[%s3 + $0x38] sm:$0xff] %v1152
  %1217 = vst [vmem:[%s3 + $0x40] sm:$0xff] %v1153
  %1218 = vst [vmem:[%s3 + $0x48] sm:$0xff] %v1154
  %1219 = vst [vmem:[%s3 + $0x50] sm:$0xff] %v1155
  %1220 = vst [vmem:[%s3 + $0x58] sm:$0xff] %v1156
  %1221 = vst [vmem:[%s3 + $0x60] sm:$0xff] %v1157
  %1222 = vst [vmem:[%s3 + $0x68] sm:$0xff] %v1158
  %1223 = vst [vmem:[%s3 + $0x70] sm:$0xff] %v1159
  %1224 = vst [vmem:[%s3 + $0x78] sm:$0xff] %v1160
  %1225 = vst [vmem:[%s3 + $0x80] sm:$0xff] %v1161
  %1226 = vst [vmem:[%s3 + $0x88] sm:$0xff] %v1162
  %1227 = vst [vmem:[%s3 + $0x90] sm:$0xff] %v1163
  %1228 = vst [vmem:[%s3 + $0x98] sm:$0xff] %v1164
  %1229 = vst [vmem:[%s3 + $0xa0] sm:$0xff] %v1165
  %1230 = vst [vmem:[%s3 + $0xa8] sm:$0xff] %v1166
  %1231 = vst [vmem:[%s3 + $0xb0] sm:$0xff] %v1167
  %1232 = vst [vmem:[%s3 + $0xb8] sm:$0xff] %v1168
  %1233 = vst [vmem:[%s3 + $0xc0] sm:$0xff] %v1169
  %1234 = vst [vmem:[%s3 + $0xc8] sm:$0xff] %v1170
  %1235 = vst [vmem:[%s3 + $0xd0] sm:$0xff] %v1171
  %1236 = vst [vmem:[%s3 + $0xd8] sm:$0xff] %v1172
  %1237 = vst [vmem:[%s3 + $0xe0] sm:$0xff] %v1173
  %1238 = vst [vmem:[%s3 + $0xe8] sm:$0xff] %v1174
  %1239 = vst [vmem:[%s3 + $0xf0] sm:$0xff] %v1175
  %1240 = vst [vmem:[%s3 + $0xf8] sm:$0xff] %v1176
  %1241 = vst [vmem:[%s3 + $0x100] sm:$0xff] %v1177
  %1242 = vst [vmem:[%s3 + $0x108] sm:$0xff] %v1178
  %1243 = vst [vmem:[%s3 + $0x110] sm:$0xff] %v1179
  %1244 = vst [vmem:[%s3 + $0x118] sm:$0xff] %v1180
  %1245 = vst [vmem:[%s3 + $0x120] sm:$0xff] %v1181
  %1246 = vst [vmem:[%s3 + $0x128] sm:$0xff] %v1182
  %1247 = vst [vmem:[%s3 + $0x130] sm:$0xff] %v1183
  %1248 = vst [vmem:[%s3 + $0x138] sm:$0xff] %v1184
  %1249 = vst [vmem:[%s3 + $0x140] sm:$0xff] %v1185
  %1250 = vst [vmem:[%s3 + $0x148] sm:$0xff] %v1186
  %1251 = vst [vmem:[%s3 + $0x150] sm:$0xff] %v1187
  %1252 = vst [vmem:[%s3 + $0x158] sm:$0xff] %v1188
  %1253 = vst [vmem:[%s3 + $0x160] sm:$0xff] %v1189
  %1254 = vst [vmem:[%s3 + $0x168] sm:$0xff] %v1190
  %1255 = vst [vmem:[%s3 + $0x170] sm:$0xff] %v1191
  %1256 = vst [vmem:[%s3 + $0x178] sm:$0xff] %v1192
  %1257 = vst [vmem:[%s3 + $0x180] sm:$0xff] %v1193
  %1258 = vst [vmem:[%s3 + $0x188] sm:$0xff] %v1194
  %1259 = vst [vmem:[%s3 + $0x190] sm:$0xff] %v1195
  %1260 = vst [vmem:[%s3 + $0x198] sm:$0xff] %v1196
  %1261 = vst [vmem:[%s3 + $0x1a0] sm:$0xff] %v1197
  %1262 = vst [vmem:[%s3 + $0x1a8] sm:$0xff] %v1198
  %1263 = vst [vmem:[%s3 + $0x1b0] sm:$0xff] %v1199
  %1264 = vst [vmem:[%s3 + $0x1b8] sm:$0xff] %v1200
  %1265 = vst [vmem:[%s3 + $0x1c0] sm:$0xff] %v1201
  %1266 = vst [vmem:[%s3 + $0x1c8] sm:$0xff] %v1202
  %1267 = vst [vmem:[%s3 + $0x1d0] sm:$0xff] %v1203
  %1268 = vst [vmem:[%s3 + $0x1d8] sm:$0xff] %v1204
  %1269 = vst [vmem:[%s3 + $0x1e0] sm:$0xff] %v1205
  %1270 = vst [vmem:[%s3 + $0x1e8] sm:$0xff] %v1206
  %1271 = vst [vmem:[%s3 + $0x1f0] sm:$0xff] %v1207
  %1272 = vst [vmem:[%s3 + $0x1f8] sm:$0xff] %v1208
  // Predicated region
  $region14: #{generator_forward_pallas.5} parent=0 // pred_check
    _
  $region15: #{generator_forward_pallas.5} parent=0 // pred_check_branch
    %1274 = sbr.rel (0) target = $region17
  $region16: #{generator_forward_pallas.5} parent=0 // pred_region
    _
  $region17: #{generator_forward_pallas.5} parent=0 // pred_fallthru
    _
  // Predicated region
  $region18: #{generator_forward_pallas.5} parent=0 // pred_check
    _
  $region19: #{generator_forward_pallas.5} parent=0 // pred_check_branch
    %1276 = sbr.rel (0) target = $region21
  $region20: #{generator_forward_pallas.5} parent=0 // pred_region
    _
  $region21: #{generator_forward_pallas.5} parent=0 // pred_fallthru
    _

// kernel: generator_forward_pallas.6
$region0: #{generator_forward_pallas.6}
  #allocation0 [shape = 'u32[]', space=smem, size = 0x4, offset = 0x4, fixed_abs, tag = 'smem constant byte address 0x4 - core index']
  #allocation1 [shape = 'u32[144,128]{1,0:T(1,128)}', space=vmem, size = 0x12000, scoped, tag = 'internal scratch']
  %s0 = inlined_call_operand.vmem [shape: bf16[4,16,128], index: 0, kind: input, shape index: {}]
  %s1 = inlined_call_operand.vmem [shape: bf16[4,128,128], index: 1, kind: input, shape index: {}]
  %s2 = inlined_call_operand.vmem [shape: f32[16,1], index: 2, kind: input, shape index: {}]
  %s3 = inlined_call_operand.vmem [shape: f32[4,16,128], index: 3, kind: output, shape index: {}]
  %s4 = sld [smem:[#allocation0]]
  $region45: #{generator_forward_pallas.6} parent=0
    _
  %s6 = ssub.s32 1, %s4
  %s7 = scalar_select 0, %s6, %s4
  loop: start=0, step=1, limit=6
  $region2: #{generator_forward_pallas.6} parent=0 // loop_pre_header
    _
  $region3: #{generator_forward_pallas.6} parent=0 // loop_header
    %s9 = sphi 0, %s13
    %p10 = scmp.ge.s32.totalorder %s9, 6
    %s16 = sphi 0, %s28
    %s17 = sphi 0, %s24
    %s18 = sphi 0, %s16
    %s19 = sphi 0, %s17
    %s20 = sphi 0, %s18
    %s21 = sphi 0, %s19
    %s31 = sphi 0, %s33
    %s34 = sphi 0, %s31
    %s35 = sphi 0, %s34
    %s51 = sphi 0, %s35
    %s59 = sphi 0, %s61
    %s62 = sphi 0, %s59
    %s63 = sphi 0, %s62
    %s79 = sphi 0, %s63
    %s83 = sphi 0, %s83
    %s85 = sphi 0, %s83
    %s86 = sphi 0, %s85
    %s100 = sphi 0, %s86
    %s108 = sphi 0, %s110
    %s111 = sphi 0, %s108
    %s112 = sphi 0, %s111
    %s128 = sphi 0, %s112
  $region4: #{generator_forward_pallas.6} parent=0 // loop_header_branch
    %12 = sbr.rel (%p10) target = $region8
  $region5: #{generator_forward_pallas.6} parent=0 // loop_body
    %s14 = ssub.s32 %s9, 1
    %s15 = ssub.s32 %s9, 2
    %s22 = sadd.s32 1, %s17
    %p23 = scmp.ge.s32.totalorder %s22, 1
    %s24 = scalar_select %p23, 0, %s22
    %s25 = sadd.s32 1, %s16
    %s26 = scalar_select %p23, %s25, %s16
    %p27 = scmp.ge.s32.totalorder %s26, 4
    %s28 = scalar_select %p27, 0, %s26
    %s29 = ssub.s32 %s16, %s28
    %p30 = scmp.eq.s32.totalorder %s29, 0
    %s32 = sadd.s32 %s31, 1
    %s33 = scalar_select %p30, %s31, %s32
    %p36 = pneg %p30
    %p37 = scmp.eq.s32.totalorder %s9, 3
    %p38 = por %p36, %p37
    %p39 = scmp.ne.s32.totalorder %s31, %s34
    %p40 = scmp.eq.s32.totalorder %s9, 0
    %p41 = por %p39, %p40
    %p42 = scmp.ne.s32.totalorder %s31, %s34
    %p43 = scmp.eq.s32.totalorder %s14, 3
    %p44 = por %p42, %p43
    %p45 = scmp.ne.s32.totalorder %s34, %s35
    %p46 = scmp.eq.s32.totalorder %s14, 0
    %p47 = por %p45, %p46
    %p48 = scmp.ne.s32.totalorder %s34, %s35
    %p49 = scmp.eq.s32.totalorder %s15, 3
    %p50 = por %p48, %p49
    %p52 = scmp.ne.s32.totalorder %s35, %s51
    %p53 = scmp.eq.s32.totalorder %s15, 0
    %p54 = por %p52, %p53
    %s55 = ssub.s32 %s16, %s28
    %s56 = ssub.s32 %s17, %s24
    %s57 = sor.u32 %s55, %s56
    %p58 = scmp.eq.s32.totalorder %s57, 0
    %s60 = sadd.s32 %s59, 1
    %s61 = scalar_select %p58, %s59, %s60
    %p64 = pneg %p58
    %p65 = scmp.eq.s32.totalorder %s9, 3
    %p66 = por %p64, %p65
    %p67 = scmp.ne.s32.totalorder %s59, %s62
    %p68 = scmp.eq.s32.totalorder %s9, 0
    %p69 = por %p67, %p68
    %p70 = scmp.ne.s32.totalorder %s59, %s62
    %p71 = scmp.eq.s32.totalorder %s14, 3
    %p72 = por %p70, %p71
    %p73 = scmp.ne.s32.totalorder %s62, %s63
    %p74 = scmp.eq.s32.totalorder %s14, 0
    %p75 = por %p73, %p74
    %p76 = scmp.ne.s32.totalorder %s62, %s63
    %p77 = scmp.eq.s32.totalorder %s15, 3
    %p78 = por %p76, %p77
    %p80 = scmp.ne.s32.totalorder %s63, %s79
    %p81 = scmp.eq.s32.totalorder %s15, 0
    %p82 = por %p80, %p81
    %s84 = sadd.s32 %s83, 1
    %p87 = scmp.eq.s32.totalorder %s9, 3
    %p88 = scmp.ne.s32.totalorder %s83, %s85
    %p89 = scmp.eq.s32.totalorder %s9, 0
    %p90 = por %p88, %p89
    %p91 = scmp.ne.s32.totalorder %s83, %s85
    %p92 = scmp.eq.s32.totalorder %s14, 3
    %p93 = por %p91, %p92
    %p94 = scmp.ne.s32.totalorder %s85, %s86
    %p95 = scmp.eq.s32.totalorder %s14, 0
    %p96 = por %p94, %p95
    %p97 = scmp.ne.s32.totalorder %s85, %s86
    %p98 = scmp.eq.s32.totalorder %s15, 3
    %p99 = por %p97, %p98
    %p101 = scmp.ne.s32.totalorder %s86, %s100
    %p102 = scmp.eq.s32.totalorder %s15, 0
    %p103 = por %p101, %p102
    %s104 = ssub.s32 %s16, %s28
    %s105 = ssub.s32 %s17, %s24
    %s106 = sor.u32 %s104, %s105
    %p107 = scmp.eq.s32.totalorder %s106, 0
    %s109 = sadd.s32 %s108, 1
    %s110 = scalar_select %p107, %s108, %s109
    %p113 = pneg %p107
    %p114 = scmp.eq.s32.totalorder %s9, 3
    %p115 = por %p113, %p114
    %p116 = scmp.ne.s32.totalorder %s108, %s111
    %p117 = scmp.eq.s32.totalorder %s9, 0
    %p118 = por %p116, %p117
    %p119 = scmp.ne.s32.totalorder %s108, %s111
    %p120 = scmp.eq.s32.totalorder %s14, 3
    %p121 = por %p119, %p120
    %p122 = scmp.ne.s32.totalorder %s111, %s112
    %p123 = scmp.eq.s32.totalorder %s14, 0
    %p124 = por %p122, %p123
    %p125 = scmp.ne.s32.totalorder %s111, %s112
    %p126 = scmp.eq.s32.totalorder %s15, 3
    %p127 = por %p125, %p126
    %p129 = scmp.ne.s32.totalorder %s112, %s128
    %p130 = scmp.eq.s32.totalorder %s15, 0
    %p131 = por %p129, %p130
    %p132 = scmp.le.s32.totalorder 1, %s9
    %p133 = scmp.lt.s32.totalorder %s9, 5
    %p134 = pnand %p132, %p133
    %p135 = pneg %p134
    // Predicated region
    $region9: #{generator_forward_pallas.6} parent=5 // pred_check
      _
    $region10: #{generator_forward_pallas.6} parent=5 // pred_check_branch
      %137 = sbr.rel (%p134) target = $region12
    $region11: #{generator_forward_pallas.6} parent=5 // pred_region
      %s138 = ssub.s32 %s9, 1
      // Predicated region
      $region13: #{generator_forward_pallas.6} parent=11 // pred_check
        %p139 = pneg %p96
      $region14: #{generator_forward_pallas.6} parent=11 // pred_check_branch
        %141 = sbr.rel (%p139) target = $region16
      $region15: #{generator_forward_pallas.6} parent=11 // pred_region
        _
      $region16: #{generator_forward_pallas.6} parent=11 // pred_fallthru
        _
    $region12: #{generator_forward_pallas.6} parent=5 // pred_fallthru
      _
    %p142 = scmp.lt.s32.totalorder %s9, 4
    // Predicated region
    $region17: #{generator_forward_pallas.6} parent=5 // pred_check
      %p143 = pneg %p142
    $region18: #{generator_forward_pallas.6} parent=5 // pred_check_branch
      %145 = sbr.rel (%p143) target = $region20
    $region19: #{generator_forward_pallas.6} parent=5 // pred_region
      // Predicated region
      $region21: #{generator_forward_pallas.6} parent=19 // pred_check
        %p146 = pneg %p41
      $region22: #{generator_forward_pallas.6} parent=19 // pred_check_branch
        %148 = sbr.rel (%p146) target = $region24
      $region23: #{generator_forward_pallas.6} parent=19 // pred_region
        %p149 = scmp.lt.s32.totalorder %s16, 3
        %s150 = scalar_select %p149, %s16, 3
        %s151 = smul.addr %s150, 2
        %s152 = smul.addr %s151, 4
        %s153 = scalar_lea.vmem %s0, %s152
      $region24: #{generator_forward_pallas.6} parent=19 // pred_fallthru
        _
      // Predicated region
      $region25: #{generator_forward_pallas.6} parent=19 // pred_check
        %p154 = pneg %p69
      $region26: #{generator_forward_pallas.6} parent=19 // pred_check_branch
        %156 = sbr.rel (%p154) target = $region28
      $region27: #{generator_forward_pallas.6} parent=19 // pred_region
        %p157 = scmp.lt.s32.totalorder %s16, 3
        %s158 = scalar_select %p157, %s16, 3
        %p159 = scmp.lt.s32.totalorder %s17, 0
        %s160 = scalar_select %p159, %s17, 0
        %s161 = smul.addr %s158, 16
        %s162 = sadd.s32 %s160, %s161
        %s163 = smul.addr %s162, 4
        %s164 = scalar_lea.vmem %s1, %s163
      $region28: #{generator_forward_pallas.6} parent=19 // pred_fallthru
        _
    $region20: #{generator_forward_pallas.6} parent=5 // pred_fallthru
      _
    %p165 = scmp.le.s32.totalorder 1, %s9
    %p166 = scmp.lt.s32.totalorder %s9, 5
    %p167 = pnand %p165, %p166
    %p168 = pneg %p167
    // Predicated region
    $region29: #{generator_forward_pallas.6} parent=5 // pred_check
      _
    $region30: #{generator_forward_pallas.6} parent=5 // pred_check_branch
      %170 = sbr.rel (%p167) target = $region32
    $region31: #{generator_forward_pallas.6} parent=5 // pred_region
      %s171 = ssub.s32 %s9, 1
      %p172 = scmp.lt.s32.totalorder %s18, 3
      %s173 = scalar_select %p172, %s18, 3
      %s174 = smul.addr %s173, 2
      %s175 = smul.addr %s174, 4
      %s176 = scalar_lea.vmem %s0, %s175
      %p177 = pneg %p47
      %p178 = pneg %p44
      %p179 = scmp.lt.s32.totalorder %s18, 3
      %s180 = scalar_select %p179, %s18, 3
      %p181 = scmp.lt.s32.totalorder %s19, 0
      %s182 = scalar_select %p181, %s19, 0
      %s183 = smul.addr %s180, 16
      %s184 = sadd.s32 %s182, %s183
      %s185 = smul.addr %s184, 4
      %s186 = scalar_lea.vmem %s1, %s185
      %p187 = pneg %p75
      %p188 = pneg %p72
      %p189 = pneg %p96
      %p190 = pneg %p93
      %p191 = pneg %p124
      %p192 = pneg %p121
      %p193 = scmp.lt.s32.totalorder %s18, 3
      %s194 = scalar_select %p193, %s18, 3
      %p195 = scmp.lt.s32.totalorder %s19, 0
      %s196 = scalar_select %p195, %s19, 0
      %s197 = smul.addr %s194, 2
      %s198 = sadd.s32 %s196, %s197
      %s199 = smul.addr %s198, 8
      %s200 = scalar_lea.vmem %s3, %s199
      %p201 = scmp.lt.s32.totalorder %s18, 3
      %s202 = scalar_select %p201, %s18, 3
      %s203 = smul.addr %s202, 2
      %s204 = smul.addr %s203, 4
      %s205 = scalar_lea.vmem %s0, %s204
      %p206 = scmp.lt.s32.totalorder %s18, 3
      %s207 = scalar_select %p206, %s18, 3
      %p208 = scmp.lt.s32.totalorder %s19, 0
      %s209 = scalar_select %p208, %s19, 0
      %s210 = smul.addr %s207, 16
      %s211 = sadd.s32 %s209, %s210
      %s212 = smul.addr %s211, 4
      %s213 = scalar_lea.vmem %s1, %s212
      %p214 = scmp.lt.s32.totalorder %s18, 3
      %s215 = scalar_select %p214, %s18, 3
      %p216 = scmp.lt.s32.totalorder %s19, 0
      %s217 = scalar_select %p216, %s19, 0
      %s218 = smul.addr %s215, 2
      %s219 = sadd.s32 %s217, %s218
      %s220 = smul.addr %s219, 8
      %s221 = scalar_lea.vmem %s3, %s220
      %v223 = vld [vmem:[%s205] sm:$0xf]
      %v224 = vld [vmem:[%s205 + $0x4] sm:$0xf]
      %v225 = vld [vmem:[%s213] sm:$0xf]
      %v226 = vld [vmem:[%s213 + $0x4] sm:$0xf]
      %v227 = vld [vmem:[%s213 + $0x8] sm:$0xf]
      %v228 = vld [vmem:[%s213 + $0xc] sm:$0xf]
      %v229 = vld [vmem:[%s213 + $0x10] sm:$0xf]
      %v230 = vld [vmem:[%s213 + $0x14] sm:$0xf]
      %v231 = vld [vmem:[%s213 + $0x18] sm:$0xf]
      %v232 = vld [vmem:[%s213 + $0x1c] sm:$0xf]
      %v233 = vld [vmem:[%s213 + $0x20] sm:$0xf]
      %v234 = vld [vmem:[%s213 + $0x24] sm:$0xf]
      %v235 = vld [vmem:[%s213 + $0x28] sm:$0xf]
      %v236 = vld [vmem:[%s213 + $0x2c] sm:$0xf]
      %v237 = vld [vmem:[%s213 + $0x30] sm:$0xf]
      %v238 = vld [vmem:[%s213 + $0x34] sm:$0xf]
      %v239 = vld [vmem:[%s213 + $0x38] sm:$0xf]
      %v240 = vld [vmem:[%s213 + $0x3c] sm:$0xf]
      %v241 = vld [vmem:[%s2] sm:$0xff]
      %v242 = vld [vmem:[%s2 + $0x8] sm:$0xff]
      %244 = vset.pattern.permute.xlu0 0
      %245 = vperm.xlu0 %244, %v241
      %v246 = vpop.permute.xlu0 %245
      %249 = vset.pattern.permute.xlu0 0
      %250 = vperm.xlu0 %249, %v242
      %v251 = vpop.permute.xlu0 %250
      %v255 = vunpack.c.l.b16 %v223
      %v256 = vunpack.c.l.b16 %v224
      %v257 = vpack.c.b16 %v256, %v255
      %v275 = vunpack.c.l.b16 %v225
      %v276 = vunpack.c.l.b16 %v226
      %v277 = vunpack.c.l.b16 %v227
      %v278 = vunpack.c.l.b16 %v228
      %v279 = vunpack.c.l.b16 %v229
      %v280 = vunpack.c.l.b16 %v230
      %v281 = vunpack.c.l.b16 %v231
      %v282 = vunpack.c.l.b16 %v232
      %v283 = vunpack.c.l.b16 %v233
      %v284 = vunpack.c.l.b16 %v234
      %v285 = vunpack.c.l.b16 %v235
      %v286 = vunpack.c.l.b16 %v236
      %v287 = vunpack.c.l.b16 %v237
      %v288 = vunpack.c.l.b16 %v238
      %v289 = vunpack.c.l.b16 %v239
      %v290 = vunpack.c.l.b16 %v240
      %v291 = vpack.c.b16 %v276, %v275
      %v292 = vpack.c.b16 %v278, %v277
      %v293 = vpack.c.b16 %v280, %v279
      %v294 = vpack.c.b16 %v282, %v281
      %v295 = vpack.c.b16 %v284, %v283
      %v296 = vpack.c.b16 %v286, %v285
      %v297 = vpack.c.b16 %v288, %v287
      %v298 = vpack.c.b16 %v290, %v289
      %307 = vmatprep.subr.bf16.mxu0 0
      %308 = vmatpush1.bf16.msra.mxu0 %v291
      %309 = vmatprep.subr.bf16.mxu0 0
      %310 = vmatpush1.bf16.msra.mxu0 %v292
      %311 = vmatprep.subr.bf16.mxu0 0
      %312 = vmatpush1.bf16.msra.mxu0 %v293
      %313 = vmatprep.subr.bf16.mxu0 0
      %314 = vmatpush1.bf16.msra.mxu0 %v294
      %315 = vmatprep.subr.bf16.mxu0 0
      %316 = vmatpush1.bf16.msra.mxu0 %v295
      %317 = vmatprep.subr.bf16.mxu0 0
      %318 = vmatpush1.bf16.msra.mxu0 %v296
      %319 = vmatprep.subr.bf16.mxu0 0
      %320 = vmatpush1.bf16.msra.mxu0 %v297
      %321 = vmatprep.subr.bf16.mxu0 0
      %322 = vmatpush1.bf16.msra.mxu0 %v298
      %323 = vmatprep.subr.bf16.mxu0 0
      %324 = vmatpush1.bf16.msra.mxu0 0
      %325 = vmatprep.subr.bf16.mxu0 0
      %326 = vmatpush1.bf16.msra.mxu0 0
      %327 = vmatprep.subr.bf16.mxu0 0
      %328 = vmatpush1.bf16.msra.mxu0 0
      %329 = vmatprep.subr.bf16.mxu0 0
      %330 = vmatpush1.bf16.msra.mxu0 0
      %331 = vmatprep.subr.bf16.mxu0 0
      %332 = vmatpush1.bf16.msra.mxu0 0
      %333 = vmatprep.subr.bf16.mxu0 0
      %334 = vmatpush1.bf16.msra.mxu0 0
      %335 = vmatprep.subr.bf16.mxu0 0
      %336 = vmatpush1.bf16.msra.mxu0 0
      %337 = vmatprep.subr.bf16.mxu0 0
      %338 = vmatpush1.bf16.msra.mxu0 0
      %339 = vmatprep.mubr.bf16.mxu0 0
      %340 = vmatmul.mubr.bf16.gmra.mrb[0].mxu0 %v257
      %v341 = vpop.f32.mrb[0].mxu0
      %v342 = vadd.f32 %v246, %v341
      %v343 = vpop.f32.mrb[0].mxu0
      %v344 = vpop.f32.mrb[0].mxu0
      %v345 = vadd.f32 %v251, %v344
      %v346 = vpop.f32.mrb[0].mxu0
      %347 = vdwg.mxu0
      %vm348 = vcmp.ge.f32.partialorder %v342, 0.0
      %vm349 = vcmp.ge.f32.partialorder %v345, 0.0
      %v350 = vmul.f32 %v342, 0.2
      %v351 = vmul.f32 %v345, 0.2
      %v352 = vsel %vm348, %v342, %v350
      %v353 = vsel %vm349, %v345, %v351
      %354 = vst [vmem:[%s221] sm:$0xff] %v352
      %355 = vst [vmem:[%s221 + $0x8] sm:$0xff] %v353
      %p356 = scmp.lt.s32.totalorder %s18, 3
      %s357 = scalar_select %p356, %s18, 3
      %p358 = scmp.lt.s32.totalorder %s19, 0
      %s359 = scalar_select %p358, %s19, 0
      %s360 = smul.addr %s357, 2
      %s361 = sadd.s32 %s359, %s360
      %s362 = smul.addr %s361, 8
      %s363 = scalar_lea.vmem %s3, %s362
      // Predicated region
      $region33: #{generator_forward_pallas.6} parent=31 // pred_check
        %p364 = pneg %p121
      $region34: #{generator_forward_pallas.6} parent=31 // pred_check_branch
        %366 = sbr.rel (%p364) target = $region36
      $region35: #{generator_forward_pallas.6} parent=31 // pred_region
        _
      $region36: #{generator_forward_pallas.6} parent=31 // pred_fallthru
        _
    $region32: #{generator_forward_pallas.6} parent=5 // pred_fallthru
      _
    %p367 = scmp.le.s32.totalorder 2, %s9
    // Predicated region
    $region37: #{generator_forward_pallas.6} parent=5 // pred_check
      %p368 = pneg %p367
    $region38: #{generator_forward_pallas.6} parent=5 // pred_check_branch
      %370 = sbr.rel (%p368) target = $region40
    $region39: #{generator_forward_pallas.6} parent=5 // pred_region
      %s371 = ssub.s32 %s9, 2
      // Predicated region
      $region41: #{generator_forward_pallas.6} parent=39 // pred_check
        %p372 = pneg %p127
      $region42: #{generator_forward_pallas.6} parent=39 // pred_check_branch
        %374 = sbr.rel (%p372) target = $region44
      $region43: #{generator_forward_pallas.6} parent=39 // pred_region
        %p375 = scmp.lt.s32.totalorder %s20, 3
        %s376 = scalar_select %p375, %s20, 3
        %p377 = scmp.lt.s32.totalorder %s21, 0
        %s378 = scalar_select %p377, %s21, 0
        %s379 = smul.addr %s376, 2
        %s380 = sadd.s32 %s378, %s379
        %s381 = smul.addr %s380, 8
        %s382 = scalar_lea.vmem %s3, %s381
      $region44: #{generator_forward_pallas.6} parent=39 // pred_fallthru
        _
    $region40: #{generator_forward_pallas.6} parent=5 // pred_fallthru
      _
  $region6: #{generator_forward_pallas.6} parent=0 // loop_footer
    %s13 = sadd.s32 1, %s9
  $region7: #{generator_forward_pallas.6} parent=0 // loop_footer_branch
    %8 = sbr.rel target = $region3
  $region8: #{generator_forward_pallas.6} parent=0 // loop_exit
    _

// kernel: generator_forward_pallas.7
$region0: #{generator_forward_pallas.7}
  #allocation0 [shape = 'u32[]', space=smem, size = 0x4, offset = 0x4, fixed_abs, tag = 'smem constant byte address 0x4 - core index']
  #allocation1 [shape = 'u32[144,128]{1,0:T(1,128)}', space=vmem, size = 0x12000, scoped, tag = 'internal scratch']
  %s0 = inlined_call_operand.vmem [shape: bf16[4,8,64], index: 0, kind: input, shape index: {}]
  %s1 = inlined_call_operand.vmem [shape: bf16[4,64,128], index: 1, kind: input, shape index: {}]
  %s2 = inlined_call_operand.vmem [shape: f32[8,1], index: 2, kind: input, shape index: {}]
  %s3 = inlined_call_operand.vmem [shape: f32[4,8,128], index: 3, kind: output, shape index: {}]
  %s4 = sld [smem:[#allocation0]]
  $region45: #{generator_forward_pallas.7} parent=0
    _
  %s6 = ssub.s32 1, %s4
  %s7 = scalar_select 0, %s6, %s4
  loop: start=0, step=1, limit=6
  $region2: #{generator_forward_pallas.7} parent=0 // loop_pre_header
    _
  $region3: #{generator_forward_pallas.7} parent=0 // loop_header
    %s9 = sphi 0, %s13
    %p10 = scmp.ge.s32.totalorder %s9, 6
    %s16 = sphi 0, %s28
    %s17 = sphi 0, %s24
    %s18 = sphi 0, %s16
    %s19 = sphi 0, %s17
    %s20 = sphi 0, %s18
    %s21 = sphi 0, %s19
    %s31 = sphi 0, %s33
    %s34 = sphi 0, %s31
    %s35 = sphi 0, %s34
    %s51 = sphi 0, %s35
    %s59 = sphi 0, %s61
    %s62 = sphi 0, %s59
    %s63 = sphi 0, %s62
    %s79 = sphi 0, %s63
    %s83 = sphi 0, %s83
    %s85 = sphi 0, %s83
    %s86 = sphi 0, %s85
    %s100 = sphi 0, %s86
    %s108 = sphi 0, %s110
    %s111 = sphi 0, %s108
    %s112 = sphi 0, %s111
    %s128 = sphi 0, %s112
  $region4: #{generator_forward_pallas.7} parent=0 // loop_header_branch
    %12 = sbr.rel (%p10) target = $region8
  $region5: #{generator_forward_pallas.7} parent=0 // loop_body
    %s14 = ssub.s32 %s9, 1
    %s15 = ssub.s32 %s9, 2
    %s22 = sadd.s32 1, %s17
    %p23 = scmp.ge.s32.totalorder %s22, 1
    %s24 = scalar_select %p23, 0, %s22
    %s25 = sadd.s32 1, %s16
    %s26 = scalar_select %p23, %s25, %s16
    %p27 = scmp.ge.s32.totalorder %s26, 4
    %s28 = scalar_select %p27, 0, %s26
    %s29 = ssub.s32 %s16, %s28
    %p30 = scmp.eq.s32.totalorder %s29, 0
    %s32 = sadd.s32 %s31, 1
    %s33 = scalar_select %p30, %s31, %s32
    %p36 = pneg %p30
    %p37 = scmp.eq.s32.totalorder %s9, 3
    %p38 = por %p36, %p37
    %p39 = scmp.ne.s32.totalorder %s31, %s34
    %p40 = scmp.eq.s32.totalorder %s9, 0
    %p41 = por %p39, %p40
    %p42 = scmp.ne.s32.totalorder %s31, %s34
    %p43 = scmp.eq.s32.totalorder %s14, 3
    %p44 = por %p42, %p43
    %p45 = scmp.ne.s32.totalorder %s34, %s35
    %p46 = scmp.eq.s32.totalorder %s14, 0
    %p47 = por %p45, %p46
    %p48 = scmp.ne.s32.totalorder %s34, %s35
    %p49 = scmp.eq.s32.totalorder %s15, 3
    %p50 = por %p48, %p49
    %p52 = scmp.ne.s32.totalorder %s35, %s51
    %p53 = scmp.eq.s32.totalorder %s15, 0
    %p54 = por %p52, %p53
    %s55 = ssub.s32 %s16, %s28
    %s56 = ssub.s32 %s17, %s24
    %s57 = sor.u32 %s55, %s56
    %p58 = scmp.eq.s32.totalorder %s57, 0
    %s60 = sadd.s32 %s59, 1
    %s61 = scalar_select %p58, %s59, %s60
    %p64 = pneg %p58
    %p65 = scmp.eq.s32.totalorder %s9, 3
    %p66 = por %p64, %p65
    %p67 = scmp.ne.s32.totalorder %s59, %s62
    %p68 = scmp.eq.s32.totalorder %s9, 0
    %p69 = por %p67, %p68
    %p70 = scmp.ne.s32.totalorder %s59, %s62
    %p71 = scmp.eq.s32.totalorder %s14, 3
    %p72 = por %p70, %p71
    %p73 = scmp.ne.s32.totalorder %s62, %s63
    %p74 = scmp.eq.s32.totalorder %s14, 0
    %p75 = por %p73, %p74
    %p76 = scmp.ne.s32.totalorder %s62, %s63
    %p77 = scmp.eq.s32.totalorder %s15, 3
    %p78 = por %p76, %p77
    %p80 = scmp.ne.s32.totalorder %s63, %s79
    %p81 = scmp.eq.s32.totalorder %s15, 0
    %p82 = por %p80, %p81
    %s84 = sadd.s32 %s83, 1
    %p87 = scmp.eq.s32.totalorder %s9, 3
    %p88 = scmp.ne.s32.totalorder %s83, %s85
    %p89 = scmp.eq.s32.totalorder %s9, 0
    %p90 = por %p88, %p89
    %p91 = scmp.ne.s32.totalorder %s83, %s85
    %p92 = scmp.eq.s32.totalorder %s14, 3
    %p93 = por %p91, %p92
    %p94 = scmp.ne.s32.totalorder %s85, %s86
    %p95 = scmp.eq.s32.totalorder %s14, 0
    %p96 = por %p94, %p95
    %p97 = scmp.ne.s32.totalorder %s85, %s86
    %p98 = scmp.eq.s32.totalorder %s15, 3
    %p99 = por %p97, %p98
    %p101 = scmp.ne.s32.totalorder %s86, %s100
    %p102 = scmp.eq.s32.totalorder %s15, 0
    %p103 = por %p101, %p102
    %s104 = ssub.s32 %s16, %s28
    %s105 = ssub.s32 %s17, %s24
    %s106 = sor.u32 %s104, %s105
    %p107 = scmp.eq.s32.totalorder %s106, 0
    %s109 = sadd.s32 %s108, 1
    %s110 = scalar_select %p107, %s108, %s109
    %p113 = pneg %p107
    %p114 = scmp.eq.s32.totalorder %s9, 3
    %p115 = por %p113, %p114
    %p116 = scmp.ne.s32.totalorder %s108, %s111
    %p117 = scmp.eq.s32.totalorder %s9, 0
    %p118 = por %p116, %p117
    %p119 = scmp.ne.s32.totalorder %s108, %s111
    %p120 = scmp.eq.s32.totalorder %s14, 3
    %p121 = por %p119, %p120
    %p122 = scmp.ne.s32.totalorder %s111, %s112
    %p123 = scmp.eq.s32.totalorder %s14, 0
    %p124 = por %p122, %p123
    %p125 = scmp.ne.s32.totalorder %s111, %s112
    %p126 = scmp.eq.s32.totalorder %s15, 3
    %p127 = por %p125, %p126
    %p129 = scmp.ne.s32.totalorder %s112, %s128
    %p130 = scmp.eq.s32.totalorder %s15, 0
    %p131 = por %p129, %p130
    %p132 = scmp.le.s32.totalorder 1, %s9
    %p133 = scmp.lt.s32.totalorder %s9, 5
    %p134 = pnand %p132, %p133
    %p135 = pneg %p134
    // Predicated region
    $region9: #{generator_forward_pallas.7} parent=5 // pred_check
      _
    $region10: #{generator_forward_pallas.7} parent=5 // pred_check_branch
      %137 = sbr.rel (%p134) target = $region12
    $region11: #{generator_forward_pallas.7} parent=5 // pred_region
      %s138 = ssub.s32 %s9, 1
      // Predicated region
      $region13: #{generator_forward_pallas.7} parent=11 // pred_check
        %p139 = pneg %p96
      $region14: #{generator_forward_pallas.7} parent=11 // pred_check_branch
        %141 = sbr.rel (%p139) target = $region16
      $region15: #{generator_forward_pallas.7} parent=11 // pred_region
        _
      $region16: #{generator_forward_pallas.7} parent=11 // pred_fallthru
        _
    $region12: #{generator_forward_pallas.7} parent=5 // pred_fallthru
      _
    %p142 = scmp.lt.s32.totalorder %s9, 4
    // Predicated region
    $region17: #{generator_forward_pallas.7} parent=5 // pred_check
      %p143 = pneg %p142
    $region18: #{generator_forward_pallas.7} parent=5 // pred_check_branch
      %145 = sbr.rel (%p143) target = $region20
    $region19: #{generator_forward_pallas.7} parent=5 // pred_region
      // Predicated region
      $region21: #{generator_forward_pallas.7} parent=19 // pred_check
        %p146 = pneg %p41
      $region22: #{generator_forward_pallas.7} parent=19 // pred_check_branch
        %148 = sbr.rel (%p146) target = $region24
      $region23: #{generator_forward_pallas.7} parent=19 // pred_region
        %p149 = scmp.lt.s32.totalorder %s16, 3
        %s150 = scalar_select %p149, %s16, 3
        %s151 = smul.addr %s150, 4
        %s152 = scalar_lea.vmem %s0, %s151
      $region24: #{generator_forward_pallas.7} parent=19 // pred_fallthru
        _
      // Predicated region
      $region25: #{generator_forward_pallas.7} parent=19 // pred_check
        %p153 = pneg %p69
      $region26: #{generator_forward_pallas.7} parent=19 // pred_check_branch
        %155 = sbr.rel (%p153) target = $region28
      $region27: #{generator_forward_pallas.7} parent=19 // pred_region
        %p156 = scmp.lt.s32.totalorder %s16, 3
        %s157 = scalar_select %p156, %s16, 3
        %p158 = scmp.lt.s32.totalorder %s17, 0
        %s159 = scalar_select %p158, %s17, 0
        %s160 = smul.addr %s157, 8
        %s161 = sadd.s32 %s159, %s160
        %s162 = smul.addr %s161, 4
        %s163 = scalar_lea.vmem %s1, %s162
      $region28: #{generator_forward_pallas.7} parent=19 // pred_fallthru
        _
    $region20: #{generator_forward_pallas.7} parent=5 // pred_fallthru
      _
    %p164 = scmp.le.s32.totalorder 1, %s9
    %p165 = scmp.lt.s32.totalorder %s9, 5
    %p166 = pnand %p164, %p165
    %p167 = pneg %p166
    // Predicated region
    $region29: #{generator_forward_pallas.7} parent=5 // pred_check
      _
    $region30: #{generator_forward_pallas.7} parent=5 // pred_check_branch
      %169 = sbr.rel (%p166) target = $region32
    $region31: #{generator_forward_pallas.7} parent=5 // pred_region
      %s170 = ssub.s32 %s9, 1
      %p171 = scmp.lt.s32.totalorder %s18, 3
      %s172 = scalar_select %p171, %s18, 3
      %s173 = smul.addr %s172, 4
      %s174 = scalar_lea.vmem %s0, %s173
      %p175 = pneg %p47
      %p176 = pneg %p44
      %p177 = scmp.lt.s32.totalorder %s18, 3
      %s178 = scalar_select %p177, %s18, 3
      %p179 = scmp.lt.s32.totalorder %s19, 0
      %s180 = scalar_select %p179, %s19, 0
      %s181 = smul.addr %s178, 8
      %s182 = sadd.s32 %s180, %s181
      %s183 = smul.addr %s182, 4
      %s184 = scalar_lea.vmem %s1, %s183
      %p185 = pneg %p75
      %p186 = pneg %p72
      %p187 = pneg %p96
      %p188 = pneg %p93
      %p189 = pneg %p124
      %p190 = pneg %p121
      %p191 = scmp.lt.s32.totalorder %s18, 3
      %s192 = scalar_select %p191, %s18, 3
      %p193 = scmp.lt.s32.totalorder %s19, 0
      %s194 = scalar_select %p193, %s19, 0
      %s195 = sadd.s32 %s194, %s192
      %s196 = smul.addr %s195, 8
      %s197 = scalar_lea.vmem %s3, %s196
      %p198 = scmp.lt.s32.totalorder %s18, 3
      %s199 = scalar_select %p198, %s18, 3
      %s200 = smul.addr %s199, 4
      %s201 = scalar_lea.vmem %s0, %s200
      %p202 = scmp.lt.s32.totalorder %s18, 3
      %s203 = scalar_select %p202, %s18, 3
      %p204 = scmp.lt.s32.totalorder %s19, 0
      %s205 = scalar_select %p204, %s19, 0
      %s206 = smul.addr %s203, 8
      %s207 = sadd.s32 %s205, %s206
      %s208 = smul.addr %s207, 4
      %s209 = scalar_lea.vmem %s1, %s208
      %p210 = scmp.lt.s32.totalorder %s18, 3
      %s211 = scalar_select %p210, %s18, 3
      %p212 = scmp.lt.s32.totalorder %s19, 0
      %s213 = scalar_select %p212, %s19, 0
      %s214 = sadd.s32 %s213, %s211
      %s215 = smul.addr %s214, 8
      %s216 = scalar_lea.vmem %s3, %s215
      %v218 = vld [vmem:[%s201] sm:$0xf]
      %v219 = vld [vmem:[%s209] sm:$0xf]
      %v220 = vld [vmem:[%s209 + $0x4] sm:$0xf]
      %v221 = vld [vmem:[%s209 + $0x8] sm:$0xf]
      %v222 = vld [vmem:[%s209 + $0xc] sm:$0xf]
      %v223 = vld [vmem:[%s209 + $0x10] sm:$0xf]
      %v224 = vld [vmem:[%s209 + $0x14] sm:$0xf]
      %v225 = vld [vmem:[%s209 + $0x18] sm:$0xf]
      %v226 = vld [vmem:[%s209 + $0x1c] sm:$0xf]
      %v227 = vld [vmem:[%s2] sm:$0xff]
      %229 = vset.pattern.permute.xlu0 0
      %230 = vperm.xlu0 %229, %v227
      %v231 = vpop.permute.xlu0 %230
      %v241 = vunpack.c.l.b16 %v219
      %v242 = vunpack.c.l.b16 %v220
      %v243 = vunpack.c.l.b16 %v221
      %v244 = vunpack.c.l.b16 %v222
      %v245 = vunpack.c.l.b16 %v223
      %v246 = vunpack.c.l.b16 %v224
      %v247 = vunpack.c.l.b16 %v225
      %v248 = vunpack.c.l.b16 %v226
      %v249 = vpack.c.b16 %v242, %v241
      %v250 = vpack.c.b16 %v244, %v243
      %v251 = vpack.c.b16 %v246, %v245
      %v252 = vpack.c.b16 %v248, %v247
      %vm257 = vcmask 523264
      %v259 = vsel %vm257, %v218, 0
      %261 = vmatprep.subr.bf16.mxu0 0
      %262 = vmatpush1.bf16.msra.mxu0 %v249
      %263 = vmatprep.subr.bf16.mxu0 0
      %264 = vmatpush1.bf16.msra.mxu0 %v250
      %265 = vmatprep.subr.bf16.mxu0 0
      %266 = vmatpush1.bf16.msra.mxu0 %v251
      %267 = vmatprep.subr.bf16.mxu0 0
      %268 = vmatpush1.bf16.msra.mxu0 %v252
      %269 = vmatprep.subr.bf16.mxu0 0
      %270 = vmatpush1.bf16.msra.mxu0 0
      %271 = vmatprep.subr.bf16.mxu0 0
      %272 = vmatpush1.bf16.msra.mxu0 0
      %273 = vmatprep.subr.bf16.mxu0 0
      %274 = vmatpush1.bf16.msra.mxu0 0
      %275 = vmatprep.subr.bf16.mxu0 0
      %276 = vmatpush1.bf16.msra.mxu0 0
      %277 = vmatprep.subr.bf16.mxu0 0
      %278 = vmatpush1.bf16.msra.mxu0 0
      %279 = vmatprep.subr.bf16.mxu0 0
      %280 = vmatpush1.bf16.msra.mxu0 0
      %281 = vmatprep.subr.bf16.mxu0 0
      %282 = vmatpush1.bf16.msra.mxu0 0
      %283 = vmatprep.subr.bf16.mxu0 0
      %284 = vmatpush1.bf16.msra.mxu0 0
      %285 = vmatprep.subr.bf16.mxu0 0
      %286 = vmatpush1.bf16.msra.mxu0 0
      %287 = vmatprep.subr.bf16.mxu0 0
      %288 = vmatpush1.bf16.msra.mxu0 0
      %289 = vmatprep.subr.bf16.mxu0 0
      %290 = vmatpush1.bf16.msra.mxu0 0
      %291 = vmatprep.subr.bf16.mxu0 0
      %292 = vmatpush1.bf16.msra.mxu0 0
      %293 = vmatprep.mubr.bf16.mxu0 0
      %294 = vmatmul.mubr.bf16.gmra.mrb[0].mxu0 %v259
      %v295 = vpop.f32.mrb[0].mxu0
      %v296 = vadd.f32 %v231, %v295
      %v297 = vpop.f32.mrb[0].mxu0
      %v298 = vpop.f32.mrb[0].mxu0
      %v299 = vpop.f32.mrb[0].mxu0
      %300 = vdwg.mxu0
      %vm301 = vcmp.ge.f32.partialorder %v296, 0.0
      %v302 = vmul.f32 %v296, 0.2
      %v303 = vsel %vm301, %v296, %v302
      %304 = vst [vmem:[%s216] sm:$0xff] %v303
      %p305 = scmp.lt.s32.totalorder %s18, 3
      %s306 = scalar_select %p305, %s18, 3
      %p307 = scmp.lt.s32.totalorder %s19, 0
      %s308 = scalar_select %p307, %s19, 0
      %s309 = sadd.s32 %s308, %s306
      %s310 = smul.addr %s309, 8
      %s311 = scalar_lea.vmem %s3, %s310
      // Predicated region
      $region33: #{generator_forward_pallas.7} parent=31 // pred_check
        %p312 = pneg %p121
      $region34: #{generator_forward_pallas.7} parent=31 // pred_check_branch
        %314 = sbr.rel (%p312) target = $region36
      $region35: #{generator_forward_pallas.7} parent=31 // pred_region
        _
      $region36: #{generator_forward_pallas.7} parent=31 // pred_fallthru
        _
    $region32: #{generator_forward_pallas.7} parent=5 // pred_fallthru
      _
    %p315 = scmp.le.s32.totalorder 2, %s9
    // Predicated region
    $region37: #{generator_forward_pallas.7} parent=5 // pred_check
      %p316 = pneg %p315
    $region38: #{generator_forward_pallas.7} parent=5 // pred_check_branch
      %318 = sbr.rel (%p316) target = $region40
    $region39: #{generator_forward_pallas.7} parent=5 // pred_region
      %s319 = ssub.s32 %s9, 2
      // Predicated region
      $region41: #{generator_forward_pallas.7} parent=39 // pred_check
        %p320 = pneg %p127
      $region42: #{generator_forward_pallas.7} parent=39 // pred_check_branch
        %322 = sbr.rel (%p320) target = $region44
      $region43: #{generator_forward_pallas.7} parent=39 // pred_region
        %p323 = scmp.lt.s32.totalorder %s20, 3
        %s324 = scalar_select %p323, %s20, 3
        %p325 = scmp.lt.s32.totalorder %s21, 0
        %s326 = scalar_select %p325, %s21, 0
        %s327 = sadd.s32 %s326, %s324
        %s328 = smul.addr %s327, 8
        %s329 = scalar_lea.vmem %s3, %s328
      $region44: #{generator_forward_pallas.7} parent=39 // pred_fallthru
        _
    $region40: #{generator_forward_pallas.7} parent=5 // pred_fallthru
      _
  $region6: #{generator_forward_pallas.7} parent=0 // loop_footer
    %s13 = sadd.s32 1, %s9
  $region7: #{generator_forward_pallas.7} parent=0 // loop_footer_branch
    %8 = sbr.rel target = $region3
  $region8: #{generator_forward_pallas.7} parent=0 // loop_exit
    _

// kernel: generator_forward_pallas.8
$region0: #{generator_forward_pallas.8}
  #allocation0 [shape = 'u32[]', space=smem, size = 0x4, offset = 0x4, fixed_abs, tag = 'smem constant byte address 0x4 - core index']
  #allocation1 [shape = 'u32[144,128]{1,0:T(1,128)}', space=vmem, size = 0x12000, scoped, tag = 'internal scratch']
  %s0 = inlined_call_operand.vmem [shape: bf16[4,8,32], index: 0, kind: input, shape index: {}]
  %s1 = inlined_call_operand.vmem [shape: bf16[4,32,512], index: 1, kind: input, shape index: {}]
  %s2 = inlined_call_operand.vmem [shape: f32[8,1], index: 2, kind: input, shape index: {}]
  %s3 = inlined_call_operand.vmem [shape: f32[4,8,512], index: 3, kind: output, shape index: {}]
  %s4 = sld [smem:[#allocation0]]
  $region45: #{generator_forward_pallas.8} parent=0
    _
  %s6 = ssub.s32 1, %s4
  %s7 = scalar_select 0, %s6, %s4
  loop: start=0, step=1, limit=6
  $region2: #{generator_forward_pallas.8} parent=0 // loop_pre_header
    _
  $region3: #{generator_forward_pallas.8} parent=0 // loop_header
    %s9 = sphi 0, %s13
    %p10 = scmp.ge.s32.totalorder %s9, 6
    %s16 = sphi 0, %s28
    %s17 = sphi 0, %s24
    %s18 = sphi 0, %s16
    %s19 = sphi 0, %s17
    %s20 = sphi 0, %s18
    %s21 = sphi 0, %s19
    %s31 = sphi 0, %s33
    %s34 = sphi 0, %s31
    %s35 = sphi 0, %s34
    %s51 = sphi 0, %s35
    %s59 = sphi 0, %s61
    %s62 = sphi 0, %s59
    %s63 = sphi 0, %s62
    %s79 = sphi 0, %s63
    %s83 = sphi 0, %s83
    %s85 = sphi 0, %s83
    %s86 = sphi 0, %s85
    %s100 = sphi 0, %s86
    %s108 = sphi 0, %s110
    %s111 = sphi 0, %s108
    %s112 = sphi 0, %s111
    %s128 = sphi 0, %s112
  $region4: #{generator_forward_pallas.8} parent=0 // loop_header_branch
    %12 = sbr.rel (%p10) target = $region8
  $region5: #{generator_forward_pallas.8} parent=0 // loop_body
    %s14 = ssub.s32 %s9, 1
    %s15 = ssub.s32 %s9, 2
    %s22 = sadd.s32 1, %s17
    %p23 = scmp.ge.s32.totalorder %s22, 1
    %s24 = scalar_select %p23, 0, %s22
    %s25 = sadd.s32 1, %s16
    %s26 = scalar_select %p23, %s25, %s16
    %p27 = scmp.ge.s32.totalorder %s26, 4
    %s28 = scalar_select %p27, 0, %s26
    %s29 = ssub.s32 %s16, %s28
    %p30 = scmp.eq.s32.totalorder %s29, 0
    %s32 = sadd.s32 %s31, 1
    %s33 = scalar_select %p30, %s31, %s32
    %p36 = pneg %p30
    %p37 = scmp.eq.s32.totalorder %s9, 3
    %p38 = por %p36, %p37
    %p39 = scmp.ne.s32.totalorder %s31, %s34
    %p40 = scmp.eq.s32.totalorder %s9, 0
    %p41 = por %p39, %p40
    %p42 = scmp.ne.s32.totalorder %s31, %s34
    %p43 = scmp.eq.s32.totalorder %s14, 3
    %p44 = por %p42, %p43
    %p45 = scmp.ne.s32.totalorder %s34, %s35
    %p46 = scmp.eq.s32.totalorder %s14, 0
    %p47 = por %p45, %p46
    %p48 = scmp.ne.s32.totalorder %s34, %s35
    %p49 = scmp.eq.s32.totalorder %s15, 3
    %p50 = por %p48, %p49
    %p52 = scmp.ne.s32.totalorder %s35, %s51
    %p53 = scmp.eq.s32.totalorder %s15, 0
    %p54 = por %p52, %p53
    %s55 = ssub.s32 %s16, %s28
    %s56 = ssub.s32 %s17, %s24
    %s57 = sor.u32 %s55, %s56
    %p58 = scmp.eq.s32.totalorder %s57, 0
    %s60 = sadd.s32 %s59, 1
    %s61 = scalar_select %p58, %s59, %s60
    %p64 = pneg %p58
    %p65 = scmp.eq.s32.totalorder %s9, 3
    %p66 = por %p64, %p65
    %p67 = scmp.ne.s32.totalorder %s59, %s62
    %p68 = scmp.eq.s32.totalorder %s9, 0
    %p69 = por %p67, %p68
    %p70 = scmp.ne.s32.totalorder %s59, %s62
    %p71 = scmp.eq.s32.totalorder %s14, 3
    %p72 = por %p70, %p71
    %p73 = scmp.ne.s32.totalorder %s62, %s63
    %p74 = scmp.eq.s32.totalorder %s14, 0
    %p75 = por %p73, %p74
    %p76 = scmp.ne.s32.totalorder %s62, %s63
    %p77 = scmp.eq.s32.totalorder %s15, 3
    %p78 = por %p76, %p77
    %p80 = scmp.ne.s32.totalorder %s63, %s79
    %p81 = scmp.eq.s32.totalorder %s15, 0
    %p82 = por %p80, %p81
    %s84 = sadd.s32 %s83, 1
    %p87 = scmp.eq.s32.totalorder %s9, 3
    %p88 = scmp.ne.s32.totalorder %s83, %s85
    %p89 = scmp.eq.s32.totalorder %s9, 0
    %p90 = por %p88, %p89
    %p91 = scmp.ne.s32.totalorder %s83, %s85
    %p92 = scmp.eq.s32.totalorder %s14, 3
    %p93 = por %p91, %p92
    %p94 = scmp.ne.s32.totalorder %s85, %s86
    %p95 = scmp.eq.s32.totalorder %s14, 0
    %p96 = por %p94, %p95
    %p97 = scmp.ne.s32.totalorder %s85, %s86
    %p98 = scmp.eq.s32.totalorder %s15, 3
    %p99 = por %p97, %p98
    %p101 = scmp.ne.s32.totalorder %s86, %s100
    %p102 = scmp.eq.s32.totalorder %s15, 0
    %p103 = por %p101, %p102
    %s104 = ssub.s32 %s16, %s28
    %s105 = ssub.s32 %s17, %s24
    %s106 = sor.u32 %s104, %s105
    %p107 = scmp.eq.s32.totalorder %s106, 0
    %s109 = sadd.s32 %s108, 1
    %s110 = scalar_select %p107, %s108, %s109
    %p113 = pneg %p107
    %p114 = scmp.eq.s32.totalorder %s9, 3
    %p115 = por %p113, %p114
    %p116 = scmp.ne.s32.totalorder %s108, %s111
    %p117 = scmp.eq.s32.totalorder %s9, 0
    %p118 = por %p116, %p117
    %p119 = scmp.ne.s32.totalorder %s108, %s111
    %p120 = scmp.eq.s32.totalorder %s14, 3
    %p121 = por %p119, %p120
    %p122 = scmp.ne.s32.totalorder %s111, %s112
    %p123 = scmp.eq.s32.totalorder %s14, 0
    %p124 = por %p122, %p123
    %p125 = scmp.ne.s32.totalorder %s111, %s112
    %p126 = scmp.eq.s32.totalorder %s15, 3
    %p127 = por %p125, %p126
    %p129 = scmp.ne.s32.totalorder %s112, %s128
    %p130 = scmp.eq.s32.totalorder %s15, 0
    %p131 = por %p129, %p130
    %p132 = scmp.le.s32.totalorder 1, %s9
    %p133 = scmp.lt.s32.totalorder %s9, 5
    %p134 = pnand %p132, %p133
    %p135 = pneg %p134
    // Predicated region
    $region9: #{generator_forward_pallas.8} parent=5 // pred_check
      _
    $region10: #{generator_forward_pallas.8} parent=5 // pred_check_branch
      %137 = sbr.rel (%p134) target = $region12
    $region11: #{generator_forward_pallas.8} parent=5 // pred_region
      %s138 = ssub.s32 %s9, 1
      // Predicated region
      $region13: #{generator_forward_pallas.8} parent=11 // pred_check
        %p139 = pneg %p96
      $region14: #{generator_forward_pallas.8} parent=11 // pred_check_branch
        %141 = sbr.rel (%p139) target = $region16
      $region15: #{generator_forward_pallas.8} parent=11 // pred_region
        _
      $region16: #{generator_forward_pallas.8} parent=11 // pred_fallthru
        _
    $region12: #{generator_forward_pallas.8} parent=5 // pred_fallthru
      _
    %p142 = scmp.lt.s32.totalorder %s9, 4
    // Predicated region
    $region17: #{generator_forward_pallas.8} parent=5 // pred_check
      %p143 = pneg %p142
    $region18: #{generator_forward_pallas.8} parent=5 // pred_check_branch
      %145 = sbr.rel (%p143) target = $region20
    $region19: #{generator_forward_pallas.8} parent=5 // pred_region
      // Predicated region
      $region21: #{generator_forward_pallas.8} parent=19 // pred_check
        %p146 = pneg %p41
      $region22: #{generator_forward_pallas.8} parent=19 // pred_check_branch
        %148 = sbr.rel (%p146) target = $region24
      $region23: #{generator_forward_pallas.8} parent=19 // pred_region
        %p149 = scmp.lt.s32.totalorder %s16, 3
        %s150 = scalar_select %p149, %s16, 3
        %s151 = smul.addr %s150, 4
        %s152 = scalar_lea.vmem %s0, %s151
      $region24: #{generator_forward_pallas.8} parent=19 // pred_fallthru
        _
      // Predicated region
      $region25: #{generator_forward_pallas.8} parent=19 // pred_check
        %p153 = pneg %p69
      $region26: #{generator_forward_pallas.8} parent=19 // pred_check_branch
        %155 = sbr.rel (%p153) target = $region28
      $region27: #{generator_forward_pallas.8} parent=19 // pred_region
        %s156 = smul.u32 4, %s17
        %p157 = scmp.lt.s32.totalorder %s16, 3
        %s158 = scalar_select %p157, %s16, 3
        %p159 = scmp.lt.s32.totalorder %s156, 3
        %s160 = scalar_select %p159, %s156, 3
        %s161 = smul.addr %s158, 16
        %s162 = sadd.s32 %s160, %s161
        %s163 = smul.addr %s162, 4
        %s164 = scalar_lea.vmem %s1, %s163
        %s165 = smul.u32 4, %s17
      $region28: #{generator_forward_pallas.8} parent=19 // pred_fallthru
        _
    $region20: #{generator_forward_pallas.8} parent=5 // pred_fallthru
      _
    %p166 = scmp.le.s32.totalorder 1, %s9
    %p167 = scmp.lt.s32.totalorder %s9, 5
    %p168 = pnand %p166, %p167
    %p169 = pneg %p168
    // Predicated region
    $region29: #{generator_forward_pallas.8} parent=5 // pred_check
      _
    $region30: #{generator_forward_pallas.8} parent=5 // pred_check_branch
      %171 = sbr.rel (%p168) target = $region32
    $region31: #{generator_forward_pallas.8} parent=5 // pred_region
      %s172 = ssub.s32 %s9, 1
      %p173 = scmp.lt.s32.totalorder %s18, 3
      %s174 = scalar_select %p173, %s18, 3
      %s175 = smul.addr %s174, 4
      %s176 = scalar_lea.vmem %s0, %s175
      %p177 = pneg %p47
      %p178 = pneg %p44
      %s179 = smul.u32 4, %s19
      %p180 = scmp.lt.s32.totalorder %s18, 3
      %s181 = scalar_select %p180, %s18, 3
      %p182 = scmp.lt.s32.totalorder %s179, 3
      %s183 = scalar_select %p182, %s179, 3
      %s184 = smul.addr %s181, 16
      %s185 = sadd.s32 %s183, %s184
      %s186 = smul.addr %s185, 4
      %s187 = scalar_lea.vmem %s1, %s186
      %p188 = pneg %p75
      %p189 = pneg %p72
      %p190 = pneg %p96
      %p191 = pneg %p93
      %p192 = pneg %p124
      %p193 = pneg %p121
      %s194 = smul.u32 4, %s19
      %p195 = scmp.lt.s32.totalorder %s18, 3
      %s196 = scalar_select %p195, %s18, 3
      %p197 = scmp.lt.s32.totalorder %s194, 3
      %s198 = scalar_select %p197, %s194, 3
      %s199 = smul.addr %s196, 4
      %s200 = sadd.s32 %s198, %s199
      %s201 = smul.addr %s200, 8
      %s202 = scalar_lea.vmem %s3, %s201
      %p203 = scmp.lt.s32.totalorder %s18, 3
      %s204 = scalar_select %p203, %s18, 3
      %s205 = smul.addr %s204, 4
      %s206 = scalar_lea.vmem %s0, %s205
      %s207 = smul.u32 4, %s19
      %p208 = scmp.lt.s32.totalorder %s18, 3
      %s209 = scalar_select %p208, %s18, 3
      %p210 = scmp.lt.s32.totalorder %s207, 3
      %s211 = scalar_select %p210, %s207, 3
      %s212 = smul.addr %s209, 16
      %s213 = sadd.s32 %s211, %s212
      %s214 = smul.addr %s213, 4
      %s215 = scalar_lea.vmem %s1, %s214
      %s216 = smul.u32 4, %s19
      %s217 = smul.u32 4, %s19
      %p218 = scmp.lt.s32.totalorder %s18, 3
      %s219 = scalar_select %p218, %s18, 3
      %p220 = scmp.lt.s32.totalorder %s217, 3
      %s221 = scalar_select %p220, %s217, 3
      %s222 = smul.addr %s219, 4
      %s223 = sadd.s32 %s221, %s222
      %s224 = smul.addr %s223, 8
      %s225 = scalar_lea.vmem %s3, %s224
      %s226 = smul.u32 4, %s19
      %v228 = vld [vmem:[%s206] sm:$0xf]
      %v229 = vld [vmem:[%s215] sm:$0xff]
      %v230 = vld [vmem:[%s215 + $0x8] sm:$0xff]
      %v231 = vld [vmem:[%s215 + $0x10] sm:$0xff]
      %v232 = vld [vmem:[%s215 + $0x18] sm:$0xff]
      %v233 = vld [vmem:[%s215 + $0x20] sm:$0xff]
      %v234 = vld [vmem:[%s215 + $0x28] sm:$0xff]
      %v235 = vld [vmem:[%s215 + $0x30] sm:$0xff]
      %v236 = vld [vmem:[%s215 + $0x38] sm:$0xff]
      %v237 = vld [vmem:[%s2] sm:$0xff]
      %239 = vset.pattern.permute.xlu0 0
      %240 = vperm.xlu0 %239, %v237
      %v241 = vpop.permute.xlu0 %240
      %v251 = vunpack.c.l.b16 %v229
      %v252 = vunpack.c.h.b16 %v229
      %v253 = vunpack.c.l.b16 %v230
      %v254 = vunpack.c.h.b16 %v230
      %v255 = vunpack.c.l.b16 %v231
      %v256 = vunpack.c.h.b16 %v231
      %v257 = vunpack.c.l.b16 %v232
      %v258 = vunpack.c.h.b16 %v232
      %v259 = vunpack.c.l.b16 %v233
      %v260 = vunpack.c.h.b16 %v233
      %v261 = vunpack.c.l.b16 %v234
      %v262 = vunpack.c.h.b16 %v234
      %v263 = vunpack.c.l.b16 %v235
      %v264 = vunpack.c.h.b16 %v235
      %v265 = vunpack.c.l.b16 %v236
      %v266 = vunpack.c.h.b16 %v236
      %v267 = vpack.c.b16 %v255, %v251
      %v268 = vpack.c.b16 %v256, %v252
      %v269 = vpack.c.b16 %v257, %v253
      %v270 = vpack.c.b16 %v258, %v254
      %v271 = vpack.c.b16 %v263, %v259
      %v272 = vpack.c.b16 %v264, %v260
      %v273 = vpack.c.b16 %v265, %v261
      %v274 = vpack.c.b16 %v266, %v262
      %vm283 = vcmask 261120
      %v285 = vsel %vm283, %v228, 0
      %287 = vmatprep.subr.bf16.mxu0 %v268
      %288 = vmatpush1.bf16.msra.mxu0 %v267
      %289 = vmatprep.subr.bf16.mxu0 %v272
      %290 = vmatpush1.bf16.msra.mxu0 %v271
      %291 = vmatprep.subr.bf16.mxu0 0
      %292 = vmatpush1.bf16.msra.mxu0 0
      %293 = vmatprep.subr.bf16.mxu0 0
      %294 = vmatpush1.bf16.msra.mxu0 0
      %295 = vmatprep.subr.bf16.mxu0 0
      %296 = vmatpush1.bf16.msra.mxu0 0
      %297 = vmatprep.subr.bf16.mxu0 0
      %298 = vmatpush1.bf16.msra.mxu0 0
      %299 = vmatprep.subr.bf16.mxu0 0
      %300 = vmatpush1.bf16.msra.mxu0 0
      %301 = vmatprep.subr.bf16.mxu0 0
      %302 = vmatpush1.bf16.msra.mxu0 0
      %303 = vmatprep.subr.bf16.mxu0 0
      %304 = vmatpush1.bf16.msra.mxu0 0
      %305 = vmatprep.subr.bf16.mxu0 0
      %306 = vmatpush1.bf16.msra.mxu0 0
      %307 = vmatprep.subr.bf16.mxu0 0
      %308 = vmatpush1.bf16.msra.mxu0 0
      %309 = vmatprep.subr.bf16.mxu0 0
      %310 = vmatpush1.bf16.msra.mxu0 0
      %311 = vmatprep.subr.bf16.mxu0 0
      %312 = vmatpush1.bf16.msra.mxu0 0
      %313 = vmatprep.subr.bf16.mxu0 0
      %314 = vmatpush1.bf16.msra.mxu0 0
      %315 = vmatprep.subr.bf16.mxu0 0
      %316 = vmatpush1.bf16.msra.mxu0 0
      %317 = vmatprep.subr.bf16.mxu0 0
      %318 = vmatpush1.bf16.msra.mxu0 0
      %319 = vmatprep.mubr.bf16.mxu0 0
      %320 = vmatmul.mubr.bf16.gmra.mrb[0].mxu0 %v285
      %v321 = vpop.f32.mrb[0].mxu0
      %v322 = vadd.f32 %v241, %v321
      %v323 = vpop.f32.mrb[0].mxu0
      %v324 = vadd.f32 %v241, %v323
      %v325 = vpop.f32.mrb[0].mxu0
      %v326 = vpop.f32.mrb[0].mxu0
      %327 = vdwg.mxu0
      %328 = vmatprep.subr.bf16.mxu0 %v270
      %329 = vmatpush1.bf16.msra.mxu0 %v269
      %330 = vmatprep.subr.bf16.mxu0 %v274
      %331 = vmatpush1.bf16.msra.mxu0 %v273
      %332 = vmatprep.subr.bf16.mxu0 0
      %333 = vmatpush1.bf16.msra.mxu0 0
      %334 = vmatprep.subr.bf16.mxu0 0
      %335 = vmatpush1.bf16.msra.mxu0 0
      %336 = vmatprep.subr.bf16.mxu0 0
      %337 = vmatpush1.bf16.msra.mxu0 0
      %338 = vmatprep.subr.bf16.mxu0 0
      %339 = vmatpush1.bf16.msra.mxu0 0
      %340 = vmatprep.subr.bf16.mxu0 0
      %341 = vmatpush1.bf16.msra.mxu0 0
      %342 = vmatprep.subr.bf16.mxu0 0
      %343 = vmatpush1.bf16.msra.mxu0 0
      %344 = vmatprep.subr.bf16.mxu0 0
      %345 = vmatpush1.bf16.msra.mxu0 0
      %346 = vmatprep.subr.bf16.mxu0 0
      %347 = vmatpush1.bf16.msra.mxu0 0
      %348 = vmatprep.subr.bf16.mxu0 0
      %349 = vmatpush1.bf16.msra.mxu0 0
      %350 = vmatprep.subr.bf16.mxu0 0
      %351 = vmatpush1.bf16.msra.mxu0 0
      %352 = vmatprep.subr.bf16.mxu0 0
      %353 = vmatpush1.bf16.msra.mxu0 0
      %354 = vmatprep.subr.bf16.mxu0 0
      %355 = vmatpush1.bf16.msra.mxu0 0
      %356 = vmatprep.subr.bf16.mxu0 0
      %357 = vmatpush1.bf16.msra.mxu0 0
      %358 = vmatprep.subr.bf16.mxu0 0
      %359 = vmatpush1.bf16.msra.mxu0 0
      %360 = vmatprep.mubr.bf16.mxu0 0
      %361 = vmatmul.mubr.bf16.gmra.mrb[0].mxu0 %v285
      %v362 = vpop.f32.mrb[0].mxu0
      %v363 = vadd.f32 %v241, %v362
      %v364 = vpop.f32.mrb[0].mxu0
      %v365 = vadd.f32 %v241, %v364
      %v366 = vpop.f32.mrb[0].mxu0
      %v367 = vpop.f32.mrb[0].mxu0
      %368 = vdwg.mxu0
      %vm369 = vcmp.ge.f32.partialorder %v322, 0.0
      %vm370 = vcmp.ge.f32.partialorder %v324, 0.0
      %vm371 = vcmp.ge.f32.partialorder %v363, 0.0
      %vm372 = vcmp.ge.f32.partialorder %v365, 0.0
      %v373 = vmul.f32 %v322, 0.2
      %v374 = vmul.f32 %v324, 0.2
      %v375 = vmul.f32 %v363, 0.2
      %v376 = vmul.f32 %v365, 0.2
      %v377 = vsel %vm369, %v322, %v373
      %v378 = vsel %vm370, %v324, %v374
      %v379 = vsel %vm371, %v363, %v375
      %v380 = vsel %vm372, %v365, %v376
      %381 = vst [vmem:[%s225] sm:$0xff] %v377
      %382 = vst [vmem:[%s225 + $0x8] sm:$0xff] %v378
      %383 = vst [vmem:[%s225 + $0x10] sm:$0xff] %v379
      %384 = vst [vmem:[%s225 + $0x18] sm:$0xff] %v380
      %s385 = smul.u32 4, %s19
      %p386 = scmp.lt.s32.totalorder %s18, 3
      %s387 = scalar_select %p386, %s18, 3
      %p388 = scmp.lt.s32.totalorder %s385, 3
      %s389 = scalar_select %p388, %s385, 3
      %s390 = smul.addr %s387, 4
      %s391 = sadd.s32 %s389, %s390
      %s392 = smul.addr %s391, 8
      %s393 = scalar_lea.vmem %s3, %s392
      // Predicated region
      $region33: #{generator_forward_pallas.8} parent=31 // pred_check
        %p394 = pneg %p121
      $region34: #{generator_forward_pallas.8} parent=31 // pred_check_branch
        %396 = sbr.rel (%p394) target = $region36
      $region35: #{generator_forward_pallas.8} parent=31 // pred_region
        %s397 = smul.u32 4, %s19
      $region36: #{generator_forward_pallas.8} parent=31 // pred_fallthru
        _
    $region32: #{generator_forward_pallas.8} parent=5 // pred_fallthru
      _
    %p398 = scmp.le.s32.totalorder 2, %s9
    // Predicated region
    $region37: #{generator_forward_pallas.8} parent=5 // pred_check
      %p399 = pneg %p398
    $region38: #{generator_forward_pallas.8} parent=5 // pred_check_branch
      %401 = sbr.rel (%p399) target = $region40
    $region39: #{generator_forward_pallas.8} parent=5 // pred_region
      %s402 = ssub.s32 %s9, 2
      // Predicated region
      $region41: #{generator_forward_pallas.8} parent=39 // pred_check
        %p403 = pneg %p127
      $region42: #{generator_forward_pallas.8} parent=39 // pred_check_branch
        %405 = sbr.rel (%p403) target = $region44
      $region43: #{generator_forward_pallas.8} parent=39 // pred_region
        %s406 = smul.u32 4, %s21
        %p407 = scmp.lt.s32.totalorder %s20, 3
        %s408 = scalar_select %p407, %s20, 3
        %p409 = scmp.lt.s32.totalorder %s406, 3
        %s410 = scalar_select %p409, %s406, 3
        %s411 = smul.addr %s408, 4
        %s412 = sadd.s32 %s410, %s411
        %s413 = smul.addr %s412, 8
        %s414 = scalar_lea.vmem %s3, %s413
      $region44: #{generator_forward_pallas.8} parent=39 // pred_fallthru
        _
    $region40: #{generator_forward_pallas.8} parent=5 // pred_fallthru
      _
  $region6: #{generator_forward_pallas.8} parent=0 // loop_footer
    %s13 = sadd.s32 1, %s9
  $region7: #{generator_forward_pallas.8} parent=0 // loop_footer_branch
    %8 = sbr.rel target = $region3
  $region8: #{generator_forward_pallas.8} parent=0 // loop_exit
    _

// kernel: generator_forward_pallas.9
$region0: #{generator_forward_pallas.9}
  #allocation0 [shape = 'u32[]', space=smem, size = 0x4, offset = 0x4, fixed_abs, tag = 'smem constant byte address 0x4 - core index']
  #allocation1 [shape = 'u32[144,128]{1,0:T(1,128)}', space=vmem, size = 0x12000, scoped, tag = 'internal scratch']
  %s0 = inlined_call_operand.vmem [shape: bf16[4,8,16], index: 0, kind: input, shape index: {}]
  %s1 = inlined_call_operand.vmem [shape: bf16[4,16,2048], index: 1, kind: input, shape index: {}]
  %s2 = inlined_call_operand.vmem [shape: f32[8,1], index: 2, kind: input, shape index: {}]
  %s3 = inlined_call_operand.vmem [shape: f32[4,8,2048], index: 3, kind: output, shape index: {}]
  %s4 = sld [smem:[#allocation0]]
  $region68: #{generator_forward_pallas.9} parent=0
    _
  %s6 = ssub.s32 1, %s4
  %s7 = scalar_select 0, %s6, %s4
  $region1: #{generator_forward_pallas.9} parent=0
    #allocation2 [shape = 'u8[65536]{0}', space=vmem, size = 0x10000, scoped, tag = 'input window, operand 1']
    loop: start=0, step=1, limit=10
    $region2: #{generator_forward_pallas.9} parent=1 // loop_pre_header
      _
    $region3: #{generator_forward_pallas.9} parent=1 // loop_header
      %s9 = sphi 0, %s13
      %p10 = scmp.ge.s32.totalorder %s9, 10
      %s16 = sphi 0, %s28
      %s17 = sphi 0, %s24
      %s18 = sphi 0, %s16
      %s19 = sphi 0, %s17
      %s20 = sphi 0, %s18
      %s21 = sphi 0, %s19
      %s31 = sphi 0, %s33
      %s34 = sphi 0, %s31
      %s35 = sphi 0, %s34
      %s51 = sphi 0, %s35
      %s59 = sphi 0, %s61
      %s62 = sphi 0, %s59
      %s63 = sphi 0, %s62
      %s79 = sphi 0, %s63
      %s83 = sphi 0, %s83
      %s85 = sphi 0, %s83
      %s86 = sphi 0, %s85
      %s100 = sphi 0, %s86
      %s108 = sphi 0, %s110
      %s111 = sphi 0, %s108
      %s112 = sphi 0, %s111
      %s128 = sphi 0, %s112
    $region4: #{generator_forward_pallas.9} parent=1 // loop_header_branch
      %12 = sbr.rel (%p10) target = $region8
    $region5: #{generator_forward_pallas.9} parent=1 // loop_body
      %s14 = ssub.s32 %s9, 1
      %s15 = ssub.s32 %s9, 2
      %s22 = sadd.s32 1, %s17
      %p23 = scmp.ge.s32.totalorder %s22, 2
      %s24 = scalar_select %p23, 0, %s22
      %s25 = sadd.s32 1, %s16
      %s26 = scalar_select %p23, %s25, %s16
      %p27 = scmp.ge.s32.totalorder %s26, 4
      %s28 = scalar_select %p27, 0, %s26
      %s29 = ssub.s32 %s16, %s28
      %p30 = scmp.eq.s32.totalorder %s29, 0
      %s32 = sadd.s32 %s31, 1
      %s33 = scalar_select %p30, %s31, %s32
      %p36 = pneg %p30
      %p37 = scmp.eq.s32.totalorder %s9, 7
      %p38 = por %p36, %p37
      %p39 = scmp.ne.s32.totalorder %s31, %s34
      %p40 = scmp.eq.s32.totalorder %s9, 0
      %p41 = por %p39, %p40
      %p42 = scmp.ne.s32.totalorder %s31, %s34
      %p43 = scmp.eq.s32.totalorder %s14, 7
      %p44 = por %p42, %p43
      %p45 = scmp.ne.s32.totalorder %s34, %s35
      %p46 = scmp.eq.s32.totalorder %s14, 0
      %p47 = por %p45, %p46
      %p48 = scmp.ne.s32.totalorder %s34, %s35
      %p49 = scmp.eq.s32.totalorder %s15, 7
      %p50 = por %p48, %p49
      %p52 = scmp.ne.s32.totalorder %s35, %s51
      %p53 = scmp.eq.s32.totalorder %s15, 0
      %p54 = por %p52, %p53
      %s55 = ssub.s32 %s16, %s28
      %s56 = ssub.s32 %s17, %s24
      %s57 = sor.u32 %s55, %s56
      %p58 = scmp.eq.s32.totalorder %s57, 0
      %s60 = sadd.s32 %s59, 1
      %s61 = scalar_select %p58, %s59, %s60
      %p64 = pneg %p58
      %p65 = scmp.eq.s32.totalorder %s9, 7
      %p66 = por %p64, %p65
      %p67 = scmp.ne.s32.totalorder %s59, %s62
      %p68 = scmp.eq.s32.totalorder %s9, 0
      %p69 = por %p67, %p68
      %p70 = scmp.ne.s32.totalorder %s59, %s62
      %p71 = scmp.eq.s32.totalorder %s14, 7
      %p72 = por %p70, %p71
      %p73 = scmp.ne.s32.totalorder %s62, %s63
      %p74 = scmp.eq.s32.totalorder %s14, 0
      %p75 = por %p73, %p74
      %p76 = scmp.ne.s32.totalorder %s62, %s63
      %p77 = scmp.eq.s32.totalorder %s15, 7
      %p78 = por %p76, %p77
      %p80 = scmp.ne.s32.totalorder %s63, %s79
      %p81 = scmp.eq.s32.totalorder %s15, 0
      %p82 = por %p80, %p81
      %s84 = sadd.s32 %s83, 1
      %p87 = scmp.eq.s32.totalorder %s9, 7
      %p88 = scmp.ne.s32.totalorder %s83, %s85
      %p89 = scmp.eq.s32.totalorder %s9, 0
      %p90 = por %p88, %p89
      %p91 = scmp.ne.s32.totalorder %s83, %s85
      %p92 = scmp.eq.s32.totalorder %s14, 7
      %p93 = por %p91, %p92
      %p94 = scmp.ne.s32.totalorder %s85, %s86
      %p95 = scmp.eq.s32.totalorder %s14, 0
      %p96 = por %p94, %p95
      %p97 = scmp.ne.s32.totalorder %s85, %s86
      %p98 = scmp.eq.s32.totalorder %s15, 7
      %p99 = por %p97, %p98
      %p101 = scmp.ne.s32.totalorder %s86, %s100
      %p102 = scmp.eq.s32.totalorder %s15, 0
      %p103 = por %p101, %p102
      %s104 = ssub.s32 %s16, %s28
      %s105 = ssub.s32 %s17, %s24
      %s106 = sor.u32 %s104, %s105
      %p107 = scmp.eq.s32.totalorder %s106, 0
      %s109 = sadd.s32 %s108, 1
      %s110 = scalar_select %p107, %s108, %s109
      %p113 = pneg %p107
      %p114 = scmp.eq.s32.totalorder %s9, 7
      %p115 = por %p113, %p114
      %p116 = scmp.ne.s32.totalorder %s108, %s111
      %p117 = scmp.eq.s32.totalorder %s9, 0
      %p118 = por %p116, %p117
      %p119 = scmp.ne.s32.totalorder %s108, %s111
      %p120 = scmp.eq.s32.totalorder %s14, 7
      %p121 = por %p119, %p120
      %p122 = scmp.ne.s32.totalorder %s111, %s112
      %p123 = scmp.eq.s32.totalorder %s14, 0
      %p124 = por %p122, %p123
      %p125 = scmp.ne.s32.totalorder %s111, %s112
      %p126 = scmp.eq.s32.totalorder %s15, 7
      %p127 = por %p125, %p126
      %p129 = scmp.ne.s32.totalorder %s112, %s128
      %p130 = scmp.eq.s32.totalorder %s15, 0
      %p131 = por %p129, %p130
      %p132 = scmp.le.s32.totalorder 1, %s9
      %p133 = scmp.lt.s32.totalorder %s9, 9
      %p134 = pnand %p132, %p133
      %p135 = pneg %p134
      // Predicated region
      $region9: #{generator_forward_pallas.9} parent=5 // pred_check
        _
      $region10: #{generator_forward_pallas.9} parent=5 // pred_check_branch
        %137 = sbr.rel (%p134) target = $region12
      $region11: #{generator_forward_pallas.9} parent=5 // pred_region
        %s138 = ssub.s32 %s9, 1
        // Predicated region
        $region13: #{generator_forward_pallas.9} parent=11 // pred_check
          %p139 = pneg %p96
        $region14: #{generator_forward_pallas.9} parent=11 // pred_check_branch
          %141 = sbr.rel (%p139) target = $region16
        $region15: #{generator_forward_pallas.9} parent=11 // pred_region
          _
        $region16: #{generator_forward_pallas.9} parent=11 // pred_fallthru
          _
      $region12: #{generator_forward_pallas.9} parent=5 // pred_fallthru
        _
      %p142 = scmp.lt.s32.totalorder %s9, 8
      // Predicated region
      $region17: #{generator_forward_pallas.9} parent=5 // pred_check
        %p143 = pneg %p142
      $region18: #{generator_forward_pallas.9} parent=5 // pred_check_branch
        %145 = sbr.rel (%p143) target = $region20
      $region19: #{generator_forward_pallas.9} parent=5 // pred_region
        // Predicated region
        $region21: #{generator_forward_pallas.9} parent=19 // pred_check
          %p146 = pneg %p41
        $region22: #{generator_forward_pallas.9} parent=19 // pred_check_branch
          %148 = sbr.rel (%p146) target = $region24
        $region23: #{generator_forward_pallas.9} parent=19 // pred_region
          %p149 = scmp.lt.s32.totalorder %s16, 3
          %s150 = scalar_select %p149, %s16, 3
          %s151 = smul.addr %s150, 4
          %s152 = scalar_lea.vmem %s0, %s151
        $region24: #{generator_forward_pallas.9} parent=19 // pred_fallthru
          _
        // Predicated region
        $region25: #{generator_forward_pallas.9} parent=19 // pred_check
          %p153 = pneg %p69
        $region26: #{generator_forward_pallas.9} parent=19 // pred_check_branch
          %155 = sbr.rel (%p153) target = $region28
        $region27: #{generator_forward_pallas.9} parent=19 // pred_region
          %s156 = sand.u32 %s59, 1
          %s157 = sand.u32 %s59, 1
          %s158 = smul.addr %s157, 64
          %s159 = scalar_lea.vmem [#allocation2], %s158
          %s160 = smul.u32 8, %s17
          %s161 = smul.addr %s16, 32
          %s162 = sadd.s32 %s160, %s161
          %s163 = smul.addr %s162, 4
          %s164 = scalar_lea.vmem %s1, %s163
          // Predicated region
          $region29: #{generator_forward_pallas.9} parent=27 // pred_check
            _
          $region30: #{generator_forward_pallas.9} parent=27 // pred_check_branch
            %166 = sbr.rel (0) target = $region32
          $region31: #{generator_forward_pallas.9} parent=27 // pred_region
            // Predicated region
            $region33: #{generator_forward_pallas.9} parent=31 // pred_check
              _
            $region34: #{generator_forward_pallas.9} parent=31 // pred_check_branch
              %168 = sbr.rel (0) target = $region36
            $region35: #{generator_forward_pallas.9} parent=31 // pred_region
              loop: start=0, step=1, limit=1
              $region37: #{generator_forward_pallas.9} parent=35 // loop_pre_header
                _
              $region38: #{generator_forward_pallas.9} parent=35 // loop_header
                %s170 = sphi 0, %s174
                %p171 = scmp.ge.s32.totalorder %s170, 1
                %s175 = sphi %s164, %s164
                %s176 = sphi %s159, %s159
              $region39: #{generator_forward_pallas.9} parent=35 // loop_header_branch
                %173 = sbr.rel (%p171) target = $region43
              $region40: #{generator_forward_pallas.9} parent=35 // loop_body
                %v177 = vld [vmem:[%s175] sm:$0xff]
                %178 = vst [vmem:[%s176] sm:$0xff] %v177
                %v179 = vld [vmem:[%s175 + $0x8] sm:$0xff]
                %180 = vst [vmem:[%s176 + $0x8] sm:$0xff] %v179
                %v181 = vld [vmem:[%s175 + $0x10] sm:$0xff]
                %182 = vst [vmem:[%s176 + $0x10] sm:$0xff] %v181
                %v183 = vld [vmem:[%s175 + $0x18] sm:$0xff]
                %184 = vst [vmem:[%s176 + $0x18] sm:$0xff] %v183
                %v185 = vld [vmem:[%s175 + $0x40] sm:$0xff]
                %186 = vst [vmem:[%s176 + $0x20] sm:$0xff] %v185
                %v187 = vld [vmem:[%s175 + $0x48] sm:$0xff]
                %188 = vst [vmem:[%s176 + $0x28] sm:$0xff] %v187
                %v189 = vld [vmem:[%s175 + $0x50] sm:$0xff]
                %190 = vst [vmem:[%s176 + $0x30] sm:$0xff] %v189
                %v191 = vld [vmem:[%s175 + $0x58] sm:$0xff]
                %192 = vst [vmem:[%s176 + $0x38] sm:$0xff] %v191
              $region41: #{generator_forward_pallas.9} parent=35 // loop_footer
                %s174 = sadd.s32 1, %s170
              $region42: #{generator_forward_pallas.9} parent=35 // loop_footer_branch
                %169 = sbr.rel target = $region38
              $region43: #{generator_forward_pallas.9} parent=35 // loop_exit
                _
            $region36: #{generator_forward_pallas.9} parent=31 // pred_fallthru
              _
            // Predicated region
            $region44: #{generator_forward_pallas.9} parent=31 // pred_check
              _
            $region45: #{generator_forward_pallas.9} parent=31 // pred_check_branch
              %194 = sbr.rel target = $region47
            $region46: #{generator_forward_pallas.9} parent=31 // pred_region
              _
            $region47: #{generator_forward_pallas.9} parent=31 // pred_fallthru
              _
          $region32: #{generator_forward_pallas.9} parent=27 // pred_fallthru
            _
          %195 = vnop
        $region28: #{generator_forward_pallas.9} parent=19 // pred_fallthru
          _
      $region20: #{generator_forward_pallas.9} parent=5 // pred_fallthru
        _
      %p196 = scmp.le.s32.totalorder 1, %s9
      %p197 = scmp.lt.s32.totalorder %s9, 9
      %p198 = pnand %p196, %p197
      %p199 = pneg %p198
      // Predicated region
      $region48: #{generator_forward_pallas.9} parent=5 // pred_check
        _
      $region49: #{generator_forward_pallas.9} parent=5 // pred_check_branch
        %201 = sbr.rel (%p198) target = $region51
      $region50: #{generator_forward_pallas.9} parent=5 // pred_region
        %s202 = ssub.s32 %s9, 1
        %s203 = sand.u32 %s62, 1
        %s204 = sand.u32 %s62, 1
        %s205 = smul.addr %s204, 64
        %s206 = scalar_lea.vmem [#allocation2], %s205
        // Predicated region
        $region52: #{generator_forward_pallas.9} parent=50 // pred_check
          %p207 = pneg %p75
        $region53: #{generator_forward_pallas.9} parent=50 // pred_check_branch
          %209 = sbr.rel (%p207) target = $region55
        $region54: #{generator_forward_pallas.9} parent=50 // pred_region
          _
        $region55: #{generator_forward_pallas.9} parent=50 // pred_fallthru
          _
        %p210 = scmp.lt.s32.totalorder %s18, 3
        %s211 = scalar_select %p210, %s18, 3
        %s212 = smul.addr %s211, 4
        %s213 = scalar_lea.vmem %s0, %s212
        %p214 = pneg %p47
        %p215 = pneg %p44
        %s216 = sand.u32 %s62, 1
        %s217 = sand.u32 %s62, 1
        %s218 = smul.addr %s217, 64
        %s219 = scalar_lea.vmem [#allocation2], %s218
        %p220 = pneg %p75
        %p221 = pneg %p72
        %p222 = pneg %p96
        %p223 = pneg %p93
        %p224 = pneg %p124
        %p225 = pneg %p121
        %s226 = smul.u32 8, %s19
        %p227 = scmp.lt.s32.totalorder %s18, 3
        %s228 = scalar_select %p227, %s18, 3
        %p229 = scmp.lt.s32.totalorder %s226, 15
        %s230 = scalar_select %p229, %s226, 15
        %s231 = smul.addr %s228, 16
        %s232 = sadd.s32 %s230, %s231
        %s233 = smul.addr %s232, 8
        %s234 = scalar_lea.vmem %s3, %s233
        %p235 = scmp.lt.s32.totalorder %s18, 3
        %s236 = scalar_select %p235, %s18, 3
        %s237 = smul.addr %s236, 4
        %s238 = scalar_lea.vmem %s0, %s237
        %s239 = smul.u32 8, %s19
        %s240 = smul.u32 8, %s19
        %p241 = scmp.lt.s32.totalorder %s18, 3
        %s242 = scalar_select %p241, %s18, 3
        %p243 = scmp.lt.s32.totalorder %s240, 15
        %s244 = scalar_select %p243, %s240, 15
        %s245 = smul.addr %s242, 16
        %s246 = sadd.s32 %s244, %s245
        %s247 = smul.addr %s246, 8
        %s248 = scalar_lea.vmem %s3, %s247
        %s249 = smul.u32 8, %s19
        %v251 = vld [vmem:[%s238] sm:$0xf]
        %v252 = vld [vmem:[%s206] sm:$0xff]
        %v253 = vld [vmem:[%s206 + $0x8] sm:$0xff]
        %v254 = vld [vmem:[%s206 + $0x10] sm:$0xff]
        %v255 = vld [vmem:[%s206 + $0x18] sm:$0xff]
        %v256 = vld [vmem:[%s206 + $0x20] sm:$0xff]
        %v257 = vld [vmem:[%s206 + $0x28] sm:$0xff]
        %v258 = vld [vmem:[%s206 + $0x30] sm:$0xff]
        %v259 = vld [vmem:[%s206 + $0x38] sm:$0xff]
        %v260 = vld [vmem:[%s2] sm:$0xff]
        %262 = vset.pattern.permute.xlu0 0
        %263 = vperm.xlu0 %262, %v260
        %v264 = vpop.permute.xlu0 %263
        %v274 = vunpack.c.l.b16 %v252
        %v275 = vunpack.c.h.b16 %v252
        %v276 = vunpack.c.l.b16 %v253
        %v277 = vunpack.c.h.b16 %v253
        %v278 = vunpack.c.l.b16 %v254
        %v279 = vunpack.c.h.b16 %v254
        %v280 = vunpack.c.l.b16 %v255
        %v281 = vunpack.c.h.b16 %v255
        %v282 = vunpack.c.l.b16 %v256
        %v283 = vunpack.c.h.b16 %v256
        %v284 = vunpack.c.l.b16 %v257
        %v285 = vunpack.c.h.b16 %v257
        %v286 = vunpack.c.l.b16 %v258
        %v287 = vunpack.c.h.b16 %v258
        %v288 = vunpack.c.l.b16 %v259
        %v289 = vunpack.c.h.b16 %v259
        %v290 = vpack.c.b16 %v282, %v274
        %v291 = vpack.c.b16 %v283, %v275
        %v292 = vpack.c.b16 %v284, %v276
        %v293 = vpack.c.b16 %v285, %v277
        %v294 = vpack.c.b16 %v286, %v278
        %v295 = vpack.c.b16 %v287, %v279
        %v296 = vpack.c.b16 %v288, %v280
        %v297 = vpack.c.b16 %v289, %v281
        %vm306 = vcmask 130048
        %v308 = vsel %vm306, %v251, 0
        %310 = vmatprep.subr.bf16.mxu0 %v291
        %311 = vmatpush1.bf16.msra.mxu0 %v290
        %312 = vmatprep.subr.bf16.mxu0 0
        %313 = vmatpush1.bf16.msra.mxu0 0
        %314 = vmatprep.subr.bf16.mxu0 0
        %315 = vmatpush1.bf16.msra.mxu0 0
        %316 = vmatprep.subr.bf16.mxu0 0
        %317 = vmatpush1.bf16.msra.mxu0 0
        %318 = vmatprep.subr.bf16.mxu0 0
        %319 = vmatpush1.bf16.msra.mxu0 0
        %320 = vmatprep.subr.bf16.mxu0 0
        %321 = vmatpush1.bf16.msra.mxu0 0
        %322 = vmatprep.subr.bf16.mxu0 0
        %323 = vmatpush1.bf16.msra.mxu0 0
        %324 = vmatprep.subr.bf16.mxu0 0
        %325 = vmatpush1.bf16.msra.mxu0 0
        %326 = vmatprep.subr.bf16.mxu0 0
        %327 = vmatpush1.bf16.msra.mxu0 0
        %328 = vmatprep.subr.bf16.mxu0 0
        %329 = vmatpush1.bf16.msra.mxu0 0
        %330 = vmatprep.subr.bf16.mxu0 0
        %331 = vmatpush1.bf16.msra.mxu0 0
        %332 = vmatprep.subr.bf16.mxu0 0
        %333 = vmatpush1.bf16.msra.mxu0 0
        %334 = vmatprep.subr.bf16.mxu0 0
        %335 = vmatpush1.bf16.msra.mxu0 0
        %336 = vmatprep.subr.bf16.mxu0 0
        %337 = vmatpush1.bf16.msra.mxu0 0
        %338 = vmatprep.subr.bf16.mxu0 0
        %339 = vmatpush1.bf16.msra.mxu0 0
        %340 = vmatprep.subr.bf16.mxu0 0
        %341 = vmatpush1.bf16.msra.mxu0 0
        %342 = vmatprep.mubr.bf16.mxu0 0
        %343 = vmatmul.mubr.bf16.gmra.mrb[0].mxu0 %v308
        %v344 = vpop.f32.mrb[0].mxu0
        %v345 = vadd.f32 %v264, %v344
        %v346 = vpop.f32.mrb[0].mxu0
        %v347 = vadd.f32 %v264, %v346
        %v348 = vpop.f32.mrb[0].mxu0
        %v349 = vpop.f32.mrb[0].mxu0
        %350 = vdwg.mxu0
        %351 = vmatprep.subr.bf16.mxu0 %v293
        %352 = vmatpush1.bf16.msra.mxu0 %v292
        %353 = vmatprep.subr.bf16.mxu0 0
        %354 = vmatpush1.bf16.msra.mxu0 0
        %355 = vmatprep.subr.bf16.mxu0 0
        %356 = vmatpush1.bf16.msra.mxu0 0
        %357 = vmatprep.subr.bf16.mxu0 0
        %358 = vmatpush1.bf16.msra.mxu0 0
        %359 = vmatprep.subr.bf16.mxu0 0
        %360 = vmatpush1.bf16.msra.mxu0 0
        %361 = vmatprep.subr.bf16.mxu0 0
        %362 = vmatpush1.bf16.msra.mxu0 0
        %363 = vmatprep.subr.bf16.mxu0 0
        %364 = vmatpush1.bf16.msra.mxu0 0
        %365 = vmatprep.subr.bf16.mxu0 0
        %366 = vmatpush1.bf16.msra.mxu0 0
        %367 = vmatprep.subr.bf16.mxu0 0
        %368 = vmatpush1.bf16.msra.mxu0 0
        %369 = vmatprep.subr.bf16.mxu0 0
        %370 = vmatpush1.bf16.msra.mxu0 0
        %371 = vmatprep.subr.bf16.mxu0 0
        %372 = vmatpush1.bf16.msra.mxu0 0
        %373 = vmatprep.subr.bf16.mxu0 0
        %374 = vmatpush1.bf16.msra.mxu0 0
        %375 = vmatprep.subr.bf16.mxu0 0
        %376 = vmatpush1.bf16.msra.mxu0 0
        %377 = vmatprep.subr.bf16.mxu0 0
        %378 = vmatpush1.bf16.msra.mxu0 0
        %379 = vmatprep.subr.bf16.mxu0 0
        %380 = vmatpush1.bf16.msra.mxu0 0
        %381 = vmatprep.subr.bf16.mxu0 0
        %382 = vmatpush1.bf16.msra.mxu0 0
        %383 = vmatprep.mubr.bf16.mxu0 0
        %384 = vmatmul.mubr.bf16.gmra.mrb[0].mxu0 %v308
        %v385 = vpop.f32.mrb[0].mxu0
        %v386 = vadd.f32 %v264, %v385
        %v387 = vpop.f32.mrb[0].mxu0
        %v388 = vadd.f32 %v264, %v387
        %v389 = vpop.f32.mrb[0].mxu0
        %v390 = vpop.f32.mrb[0].mxu0
        %391 = vdwg.mxu0
        %392 = vmatprep.subr.bf16.mxu0 %v295
        %393 = vmatpush1.bf16.msra.mxu0 %v294
        %394 = vmatprep.subr.bf16.mxu0 0
        %395 = vmatpush1.bf16.msra.mxu0 0
        %396 = vmatprep.subr.bf16.mxu0 0
        %397 = vmatpush1.bf16.msra.mxu0 0
        %398 = vmatprep.subr.bf16.mxu0 0
        %399 = vmatpush1.bf16.msra.mxu0 0
        %400 = vmatprep.subr.bf16.mxu0 0
        %401 = vmatpush1.bf16.msra.mxu0 0
        %402 = vmatprep.subr.bf16.mxu0 0
        %403 = vmatpush1.bf16.msra.mxu0 0
        %404 = vmatprep.subr.bf16.mxu0 0
        %405 = vmatpush1.bf16.msra.mxu0 0
        %406 = vmatprep.subr.bf16.mxu0 0
        %407 = vmatpush1.bf16.msra.mxu0 0
        %408 = vmatprep.subr.bf16.mxu0 0
        %409 = vmatpush1.bf16.msra.mxu0 0
        %410 = vmatprep.subr.bf16.mxu0 0
        %411 = vmatpush1.bf16.msra.mxu0 0
        %412 = vmatprep.subr.bf16.mxu0 0
        %413 = vmatpush1.bf16.msra.mxu0 0
        %414 = vmatprep.subr.bf16.mxu0 0
        %415 = vmatpush1.bf16.msra.mxu0 0
        %416 = vmatprep.subr.bf16.mxu0 0
        %417 = vmatpush1.bf16.msra.mxu0 0
        %418 = vmatprep.subr.bf16.mxu0 0
        %419 = vmatpush1.bf16.msra.mxu0 0
        %420 = vmatprep.subr.bf16.mxu0 0
        %421 = vmatpush1.bf16.msra.mxu0 0
        %422 = vmatprep.subr.bf16.mxu0 0
        %423 = vmatpush1.bf16.msra.mxu0 0
        %424 = vmatprep.mubr.bf16.mxu0 0
        %425 = vmatmul.mubr.bf16.gmra.mrb[0].mxu0 %v308
        %v426 = vpop.f32.mrb[0].mxu0
        %v427 = vadd.f32 %v264, %v426
        %v428 = vpop.f32.mrb[0].mxu0
        %v429 = vadd.f32 %v264, %v428
        %v430 = vpop.f32.mrb[0].mxu0
        %v431 = vpop.f32.mrb[0].mxu0
        %432 = vdwg.mxu0
        %433 = vmatprep.subr.bf16.mxu0 %v297
        %434 = vmatpush1.bf16.msra.mxu0 %v296
        %435 = vmatprep.subr.bf16.mxu0 0
        %436 = vmatpush1.bf16.msra.mxu0 0
        %437 = vmatprep.subr.bf16.mxu0 0
        %438 = vmatpush1.bf16.msra.mxu0 0
        %439 = vmatprep.subr.bf16.mxu0 0
        %440 = vmatpush1.bf16.msra.mxu0 0
        %441 = vmatprep.subr.bf16.mxu0 0
        %442 = vmatpush1.bf16.msra.mxu0 0
        %443 = vmatprep.subr.bf16.mxu0 0
        %444 = vmatpush1.bf16.msra.mxu0 0
        %445 = vmatprep.subr.bf16.mxu0 0
        %446 = vmatpush1.bf16.msra.mxu0 0
        %447 = vmatprep.subr.bf16.mxu0 0
        %448 = vmatpush1.bf16.msra.mxu0 0
        %449 = vmatprep.subr.bf16.mxu0 0
        %450 = vmatpush1.bf16.msra.mxu0 0
        %451 = vmatprep.subr.bf16.mxu0 0
        %452 = vmatpush1.bf16.msra.mxu0 0
        %453 = vmatprep.subr.bf16.mxu0 0
        %454 = vmatpush1.bf16.msra.mxu0 0
        %455 = vmatprep.subr.bf16.mxu0 0
        %456 = vmatpush1.bf16.msra.mxu0 0
        %457 = vmatprep.subr.bf16.mxu0 0
        %458 = vmatpush1.bf16.msra.mxu0 0
        %459 = vmatprep.subr.bf16.mxu0 0
        %460 = vmatpush1.bf16.msra.mxu0 0
        %461 = vmatprep.subr.bf16.mxu0 0
        %462 = vmatpush1.bf16.msra.mxu0 0
        %463 = vmatprep.subr.bf16.mxu0 0
        %464 = vmatpush1.bf16.msra.mxu0 0
        %465 = vmatprep.mubr.bf16.mxu0 0
        %466 = vmatmul.mubr.bf16.gmra.mrb[0].mxu0 %v308
        %v467 = vpop.f32.mrb[0].mxu0
        %v468 = vadd.f32 %v264, %v467
        %v469 = vpop.f32.mrb[0].mxu0
        %v470 = vadd.f32 %v264, %v469
        %v471 = vpop.f32.mrb[0].mxu0
        %v472 = vpop.f32.mrb[0].mxu0
        %473 = vdwg.mxu0
        %v474 = vtanh.pop %v345
        %v475 = vtanh.pop %v347
        %v476 = vtanh.pop %v386
        %v477 = vtanh.pop %v388
        %v478 = vtanh.pop %v427
        %v479 = vtanh.pop %v429
        %v480 = vtanh.pop %v468
        %v481 = vtanh.pop %v470
        %482 = vst [vmem:[%s248] sm:$0xff] %v474
        %483 = vst [vmem:[%s248 + $0x8] sm:$0xff] %v475
        %484 = vst [vmem:[%s248 + $0x10] sm:$0xff] %v476
        %485 = vst [vmem:[%s248 + $0x18] sm:$0xff] %v477
        %486 = vst [vmem:[%s248 + $0x20] sm:$0xff] %v478
        %487 = vst [vmem:[%s248 + $0x28] sm:$0xff] %v479
        %488 = vst [vmem:[%s248 + $0x30] sm:$0xff] %v480
        %489 = vst [vmem:[%s248 + $0x38] sm:$0xff] %v481
        %s490 = smul.u32 8, %s19
        %p491 = scmp.lt.s32.totalorder %s18, 3
        %s492 = scalar_select %p491, %s18, 3
        %p493 = scmp.lt.s32.totalorder %s490, 15
        %s494 = scalar_select %p493, %s490, 15
        %s495 = smul.addr %s492, 16
        %s496 = sadd.s32 %s494, %s495
        %s497 = smul.addr %s496, 8
        %s498 = scalar_lea.vmem %s3, %s497
        // Predicated region
        $region56: #{generator_forward_pallas.9} parent=50 // pred_check
          %p499 = pneg %p121
        $region57: #{generator_forward_pallas.9} parent=50 // pred_check_branch
          %501 = sbr.rel (%p499) target = $region59
        $region58: #{generator_forward_pallas.9} parent=50 // pred_region
          %s502 = smul.u32 8, %s19
        $region59: #{generator_forward_pallas.9} parent=50 // pred_fallthru
          _
      $region51: #{generator_forward_pallas.9} parent=5 // pred_fallthru
        _
      %p503 = scmp.le.s32.totalorder 2, %s9
      // Predicated region
      $region60: #{generator_forward_pallas.9} parent=5 // pred_check
        %p504 = pneg %p503
      $region61: #{generator_forward_pallas.9} parent=5 // pred_check_branch
        %506 = sbr.rel (%p504) target = $region63
      $region62: #{generator_forward_pallas.9} parent=5 // pred_region
        %s507 = ssub.s32 %s9, 2
        // Predicated region
        $region64: #{generator_forward_pallas.9} parent=62 // pred_check
          %p508 = pneg %p127
        $region65: #{generator_forward_pallas.9} parent=62 // pred_check_branch
          %510 = sbr.rel (%p508) target = $region67
        $region66: #{generator_forward_pallas.9} parent=62 // pred_region
          %s511 = smul.u32 8, %s21
          %p512 = scmp.lt.s32.totalorder %s20, 3
          %s513 = scalar_select %p512, %s20, 3
          %p514 = scmp.lt.s32.totalorder %s511, 15
          %s515 = scalar_select %p514, %s511, 15
          %s516 = smul.addr %s513, 16
          %s517 = sadd.s32 %s515, %s516
          %s518 = smul.addr %s517, 8
          %s519 = scalar_lea.vmem %s3, %s518
        $region67: #{generator_forward_pallas.9} parent=62 // pred_fallthru
          _
      $region63: #{generator_forward_pallas.9} parent=5 // pred_fallthru
        _
    $region6: #{generator_forward_pallas.9} parent=1 // loop_footer
      %s13 = sadd.s32 1, %s9
    $region7: #{generator_forward_pallas.9} parent=1 // loop_footer_branch
      %8 = sbr.rel target = $region3
    $region8: #{generator_forward_pallas.9} parent=1 // loop_exit
      _

</llo_original>
